<compile_context>
chip_gen: v6e
topology: v6e:2x2x1
jax: 0.10.0
libtpu: 0.0.40
codegen_flags: <defaults>
</compile_context>

<pallas_src>
import functools

import jax
import jax.numpy as jnp
from jax.experimental import pallas as pl
from jax.experimental.pallas import tpu as pltpu

NEG_BIG = -9e15


def _round_up(x, m):
    return ((x + m - 1) // m) * m


def _vmem_budget_bytes():
    cap = 64 * 1024 * 1024
    try:
        cap = int(pltpu.get_tpu_info().vmem_capacity_bytes)
    except Exception:
        pass
    # headroom for Mosaic internal scratch / pipeline slack
    return min(int(cap * 0.7), 96 * 1024 * 1024)


def _choose_block_rows(n, requested, nheads, f_out, budget):
    """Row-block size: multiple of 32 (int8 sublane quantum), >=2 blocks when
    possible (megacore), shrunk until the VMEM estimate fits the budget."""
    half = _round_up(max(pl.cdiv(n, 2), 32), 32)
    br = max(32, min(_round_up(requested, 32), half))

    # grid-resident inputs (constant index_map), counted double-buffered
    resident = 2 * (nheads * n * f_out * 2 + nheads * 2 * n * 4)

    def step_bytes(b):
        npad = _round_up(n, b)
        return (2 * b * npad            # int8 mask strip, double-buffered
                + 20 * b * npad         # f32 (TM,N) elementwise temporaries
                + 2 * b * 128 * 4       # padded output strip, double-buffered
                + 2 * nheads * b * 2 * 4)  # query strip

    while br > 32 and resident + step_bytes(br) > budget:
        br -= 32
    return br


def _pad_rows(x, n_pad):
    """Zero-pad axis 1 (the node axis) up to n_pad."""
    pad = n_pad - x.shape[1]
    if pad == 0:
        return x
    cfg = [(0, 0)] * x.ndim
    cfg[1] = (0, pad)
    return jnp.pad(x, cfg)


# ----------------------------------------------------------------------------
# Kernel: one GAT layer, all heads fused, one row-block strip per grid step.
# ----------------------------------------------------------------------------
def gat_heads_kernel(mask_ref, qry2_ref, key2t_ref, wh_ref, out_ref, *,
                     alpha, mode, nheads, f_out, out_w):
    """Per grid step (row block of size TM):

    mask_ref:  (TM, N)            int8   adjacency strip (0 / 1)
    qry2_ref:  (nheads, TM, 2)    f32    [q | 1] query pairs for this strip
    key2t_ref: (nheads, 2, N)     f32    [1 ; k] key rows (grid-resident)
    wh_ref:    (nheads, N, F_out) bf16   values Wh (grid-resident)
    out_ref:   (TM, out_pad)      out dtype (lane-dense padded output)
    """
    neighbor = mask_ref[...].astype(jnp.float32) > 0.0      # (TM, N), once

    outs = []
    for hd in range(nheads):                                 # static unroll
        qry2 = qry2_ref[hd]                                  # (TM, 2) f32
        key2t = key2t_ref[hd]                                # (2, N)  f32

        # e[i, j] = q[i] + k[j]  via one dense-output K=2 MXU matmul.
        e = jnp.dot(qry2, key2t, preferred_element_type=jnp.float32)  # (TM, N)
        e = jnp.maximum(e, alpha * e)                        # LeakyReLU (0<alpha<1)

        logits = jnp.where(neighbor, e, NEG_BIG)             # replacement mask
        m = jnp.max(logits, axis=1, keepdims=True)
        p = jnp.exp(logits - m)                              # un-normalized probs
        denom = jnp.sum(p, axis=1, keepdims=True)

        hp = jnp.dot(p.astype(jnp.bfloat16), wh_ref[hd],
                     preferred_element_type=jnp.float32)     # (TM, F_out)
        if mode == "elu":
            hp = hp * pl.reciprocal(denom, approx=True)      # deferred norm
            outs.append(jnp.where(hp > 0, hp,
                                  jnp.exp(jnp.minimum(hp, 0.0)) - 1.0))
        else:  # "logsoftmax" over classes (dim=1); exact divide for accuracy
            hp = hp / denom
            mm = jnp.max(hp, axis=1, keepdims=True)
            z = hp - mm
            outs.append(z - jnp.log(jnp.sum(jnp.exp(z), axis=1, keepdims=True)))

    res = outs[0] if nheads == 1 else jnp.concatenate(outs, axis=1)  # (TM, out_w)
    out_pad = out_ref.shape[1]
    if out_pad > out_w:                                      # lane-dense padding
        res = jnp.concatenate(
            [res, jnp.zeros((res.shape[0], out_pad - out_w), res.dtype)], axis=1)
    out_ref[...] = res.astype(out_ref.dtype)


# ----------------------------------------------------------------------------
# Wrapper: one pallas_call per layer over a row-block grid.
# ----------------------------------------------------------------------------
def gat_layer_fused(wh, q, k, maskp, *, alpha, mode, block_rows, out_dtype,
                    vmem_limit):
    """wh: (nheads, N_pad, F_out) bf16; q, k: (nheads, N_pad) f32;
    maskp: (N_pad, N_pad) int8.  Returns (N_pad, round_up(nheads*F_out,128))."""
    nheads, n_pad, f_out = wh.shape
    assert maskp.shape == (n_pad, n_pad)
    assert n_pad % block_rows == 0
    nblocks = n_pad // block_rows
    out_w = nheads * f_out
    out_pad = _round_up(out_w, 128)

    ones_q = jnp.ones((nheads, n_pad, 1), jnp.float32)
    qry2 = jnp.concatenate([q[..., None], ones_q], axis=2)          # (H, N, 2)
    key2t = jnp.concatenate([jnp.ones((nheads, 1, n_pad), jnp.float32),
                             k[:, None, :]], axis=1)                # (H, 2, N)

    kernel = functools.partial(gat_heads_kernel, alpha=alpha, mode=mode,
                               nheads=nheads, f_out=f_out, out_w=out_w)

    flops = int(nheads * n_pad * n_pad * (2 * 2 + 2 * f_out + 8))
    transcendentals = int(nheads * n_pad * n_pad)
    bytes_accessed = int(n_pad * n_pad                       # int8 mask stream
                         + wh.size * 2 + qry2.size * 4 + key2t.size * 4
                         + n_pad * out_pad * jnp.dtype(out_dtype).itemsize)

    return pl.pallas_call(
        kernel,
        out_shape=jax.ShapeDtypeStruct((n_pad, out_pad), out_dtype),
        grid=(nblocks,),
        in_specs=[
            pl.BlockSpec((block_rows, n_pad), lambda r: (r, 0)),        # mask strip
            pl.BlockSpec((nheads, block_rows, 2), lambda r: (0, r, 0)), # queries
            pl.BlockSpec((nheads, 2, n_pad), lambda r: (0, 0, 0)),      # keys
            pl.BlockSpec((nheads, n_pad, f_out), lambda r: (0, 0, 0)),  # values
        ],
        out_specs=pl.BlockSpec((block_rows, out_pad), lambda r: (r, 0)),
        compiler_params=pltpu.CompilerParams(
            dimension_semantics=("parallel",),
            vmem_limit_bytes=vmem_limit),
        cost_estimate=pl.CostEstimate(flops=flops,
                                      transcendentals=transcendentals,
                                      bytes_accessed=bytes_accessed),
    )(maskp, qry2, key2t, wh)


def init_params(key, nfeat, nhid, nclass, nheads, embedding_num, embedding_dim):
    keys = jax.random.split(key, 2 * nheads + 3)
    params = {"nheads": nheads}
    # Embedding (padding_idx=0 -> row 0 zeroed), like nn.Embedding init (N(0,1))
    emb = jax.random.normal(keys[0], (embedding_num + 1, embedding_dim),
                            jnp.float32)
    params["embedding"] = emb.at[0].set(0.0)

    def xavier(k, shape):
        gain = 1.414
        fan_in, fan_out = shape[0], shape[1]
        bound = gain * (6.0 / (fan_in + fan_out)) ** 0.5
        return jax.random.uniform(k, shape, jnp.float32, -bound, bound)

    for i in range(nheads):
        params[f"W_{i}"] = xavier(keys[1 + 2 * i], (nfeat, nhid))
        params[f"a_{i}"] = xavier(keys[2 + 2 * i], (2 * nhid, 1))
    params["W_out"] = xavier(keys[-2], (nhid * nheads, nclass))
    params["a_out"] = xavier(keys[-1], (2 * nclass, 1))
    return params


def _project(h, W, a):
    """Wh, q = Wh@a1, k = Wh@a2  (all f32, computed once in the wrapper)."""
    f_out = W.shape[1]
    wh = h @ W                                 # (N, f_out)
    q = wh @ a[:f_out, 0]                      # (N,)
    k = wh @ a[f_out:, 0]                      # (N,)
    return wh, q, k


def gat_forward(params, x_idx, adj, *, alpha, block_rows=256):
    # embedding lookup + relu + flatten (glue, plain JAX)
    N = x_idx.shape[0]
    h = jax.nn.relu(jnp.take(params["embedding"], x_idx, axis=0)).reshape(N, -1)
    # F.dropout(training=False) -> identity

    nheads = params["nheads"]
    nhid = params["W_0"].shape[1]
    nclass = params["W_out"].shape[1]

    budget = _vmem_budget_bytes()
    br = _choose_block_rows(N, block_rows, nheads, max(nhid, nclass), budget)
    n_pad = _round_up(N, br)

    # int8 adjacency mask (0/1), padded ONCE and reused by both layers
    maskp = jnp.zeros((n_pad, n_pad), jnp.int8).at[:N, :N].set(
        (adj > 0).astype(jnp.int8))

    # ---- layer 1: all heads, hoisted projections ----
    whs, qs, ks = [], [], []
    for i in range(nheads):
        wh, q, k = _project(h, params[f"W_{i}"], params[f"a_{i}"])
        whs.append(wh); qs.append(q); ks.append(k)
    wh1 = _pad_rows(jnp.stack(whs), n_pad).astype(jnp.bfloat16)   # (H, Np, nhid)
    q1 = _pad_rows(jnp.stack(qs), n_pad)
    k1 = _pad_rows(jnp.stack(ks), n_pad)
    h1p = gat_layer_fused(wh1, q1, k1, maskp, alpha=alpha, mode="elu",
                          block_rows=br, out_dtype=jnp.bfloat16,
                          vmem_limit=budget)
    h1 = h1p[:N, :nheads * nhid]                                  # (N, H*nhid) bf16
    # F.dropout(training=False) -> identity

    # ---- layer 2 (classifier) ----
    wh, q, k = _project(h1.astype(jnp.float32), params["W_out"], params["a_out"])
    wh2 = _pad_rows(wh[None], n_pad).astype(jnp.bfloat16)
    q2 = _pad_rows(q[None], n_pad)
    k2 = _pad_rows(k[None], n_pad)
    out = gat_layer_fused(wh2, q2, k2, maskp, alpha=alpha, mode="logsoftmax",
                          block_rows=br, out_dtype=jnp.float32,
                          vmem_limit=budget)
    return out[:N, :nclass]


def gat_forward_ref(params, x_idx, adj, *, alpha):
    """Pure-jnp f32 reference (mirrors the PyTorch GraphAttentionLayer math)."""
    h = jax.nn.relu(jnp.take(params["embedding"], x_idx, axis=0))
    h = h.reshape(x_idx.shape[0], -1)

    def layer(h, W, a, concat):
        f_out = W.shape[1]
        wh = h @ W
        wh1 = wh @ a[:f_out]
        wh2 = wh @ a[f_out:]
        e = wh1 + wh2.T
        e = jnp.where(e > 0, e, alpha * e)
        att = jnp.where(adj > 0, e, NEG_BIG)
        att = jax.nn.softmax(att, axis=1)
        hp = att @ wh
        return jax.nn.elu(hp) if concat else hp

    heads = [layer(h, params[f"W_{i}"], params[f"a_{i}"], True)
             for i in range(params["nheads"])]
    h = jnp.concatenate(heads, axis=1)
    out = layer(h, params["W_out"], params["a_out"], False)
    return jax.nn.log_softmax(out, axis=1)


if __name__ == "__main__":
    # Small synthetic shapes consistent with the module's forward:
    # N nodes, each node has L token ids embedded to D dims -> nfeat = L*D.
    N, L = 128, 4
    embedding_num, embedding_dim = 50, 8
    nfeat = L * embedding_dim          # 32
    nhid, nheads, nclass = 16, 2, 8
    alpha = 0.2                        # dropout unused (inference)

    key = jax.random.PRNGKey(0)
    k_idx, k_adj, k_par = jax.random.split(key, 3)

    x_idx = jax.random.randint(k_idx, (N, L), 0, embedding_num + 1,
                               dtype=jnp.int32)
    adj = (jax.random.uniform(k_adj, (N, N)) < 0.1).astype(jnp.float32)
    adj = jnp.clip(adj + jnp.eye(N, dtype=jnp.float32), 0.0, 1.0)  # self-loops

    params = init_params(k_par, nfeat, nhid, nclass, nheads,
                         embedding_num, embedding_dim)

    out = jax.block_until_ready(
        gat_forward(params, x_idx, adj, alpha=alpha, block_rows=256))
    ref = jax.block_until_ready(gat_forward_ref(params, x_idx, adj, alpha=alpha))

    assert out.shape == (N, nclass)
    assert bool(jnp.all(jnp.isfinite(out)))
    # bf16 MXU operands with f32 accumulation -> compare against f32 reference
    # at a bf16-appropriate tolerance.
    assert jnp.allclose(out, ref, atol=5e-2, rtol=5e-2), "mismatch vs reference"

    print("KERNEL_OK")
</pallas_src>

<mosaic_0001>
module attributes {stable_mosaic.version = 11 : i64} {
  func.func @gat_heads_kernel(%arg0: i32, %arg1: memref<64x128xi8, #tpu.memory_space<vmem>>, %arg2: memref<2x64x2xf32, #tpu.memory_space<vmem>>, %arg3: memref<2x2x128xf32, #tpu.memory_space<vmem>>, %arg4: memref<2x128x16xbf16, #tpu.memory_space<vmem>>, %arg5: memref<64x128xbf16, #tpu.memory_space<vmem>>) attributes {dimension_semantics = [#tpu.dimension_semantics<parallel>], iteration_bounds = array<i64: 2>, scalar_prefetch = 0 : i64, scratch_operands = 0 : i64, tpu.core_type = #tpu.core_type<tc>, window_params = [{transform_indices = @transform_0, window_bounds = array<i64: 64, 128>}, {transform_indices = @transform_1, window_bounds = array<i64: 2, 64, 2>}, {pipeline_mode = #tpu.pipeline_mode<synchronous>, transform_indices = @transform_2, window_bounds = array<i64: 2, 2, 128>}, {pipeline_mode = #tpu.pipeline_mode<synchronous>, transform_indices = @transform_3, window_bounds = array<i64: 2, 128, 16>}, {transform_indices = @transform_4, window_bounds = array<i64: 64, 128>}]} {
    %c0 = arith.constant 0 : index
    %c0_0 = arith.constant 0 : index
    %0 = vector.load %arg1[%c0, %c0_0] : memref<64x128xi8, #tpu.memory_space<vmem>>, vector<64x128xi8>
    %1 = arith.sitofp %0 : vector<64x128xi8> to vector<64x128xf32>
    %cst = arith.constant 0.000000e+00 : f32
    %2 = vector.broadcast %cst : f32 to vector<64x128xf32>
    %3 = arith.cmpf ogt, %1, %2 : vector<64x128xf32>
    %c0_1 = arith.constant 0 : index
    %c0_2 = arith.constant 0 : index
    %c0_3 = arith.constant 0 : index
    %4 = vector.load %arg2[%c0_1, %c0_2, %c0_3] : memref<2x64x2xf32, #tpu.memory_space<vmem>>, vector<1x64x2xf32>
    %5 = vector.shape_cast %4 : vector<1x64x2xf32> to vector<64x2xf32>
    %c0_4 = arith.constant 0 : index
    %c0_5 = arith.constant 0 : index
    %c0_6 = arith.constant 0 : index
    %6 = vector.load %arg3[%c0_4, %c0_5, %c0_6] : memref<2x2x128xf32, #tpu.memory_space<vmem>>, vector<1x2x128xf32>
    %7 = vector.shape_cast %6 : vector<1x2x128xf32> to vector<2x128xf32>
    %cst_7 = arith.constant dense<0.000000e+00> : vector<64x128xf32>
    %8 = tpu.matmul %5, %7, %cst_7 {dimension_numbers = #tpu.dot_dimension_numbers<[1], [0], [0], [1], [0, 0, 1, 1], [], []>} : vector<64x2xf32>, vector<2x128xf32>, vector<64x128xf32> -> vector<64x128xf32>
    %cst_8 = arith.constant 2.000000e-01 : f32
    %9 = vector.broadcast %cst_8 : f32 to vector<64x128xf32>
    %10 = arith.mulf %9, %8 : vector<64x128xf32>
    %11 = arith.maximumf %8, %10 : vector<64x128xf32>
    %cst_9 = arith.constant -9.000000e+15 : f32
    %12 = vector.broadcast %cst_9 : f32 to vector<64x128xf32>
    %13 = arith.select %3, %11, %12 : vector<64x128xi1>, vector<64x128xf32>
    %cst_10 = arith.constant dense<0xFF800000> : vector<64xf32>
    %14 = vector.multi_reduction <maximumf>, %13, %cst_10 [1] : vector<64x128xf32> to vector<64xf32>
    %15 = vector.shape_cast %14 : vector<64xf32> to vector<64x1xf32>
    %16 = vector.broadcast %15 : vector<64x1xf32> to vector<64x128xf32>
    %17 = arith.subf %13, %16 : vector<64x128xf32>
    %18 = math.exp %17 : vector<64x128xf32>
    %cst_11 = arith.constant dense<0.000000e+00> : vector<64xf32>
    %19 = vector.multi_reduction <add>, %18, %cst_11 [1] : vector<64x128xf32> to vector<64xf32>
    %20 = vector.shape_cast %19 : vector<64xf32> to vector<64x1xf32>
    %21 = arith.truncf %18 : vector<64x128xf32> to vector<64x128xbf16>
    %c0_12 = arith.constant 0 : index
    %c0_13 = arith.constant 0 : index
    %c0_14 = arith.constant 0 : index
    %22 = vector.load %arg4[%c0_12, %c0_13, %c0_14] : memref<2x128x16xbf16, #tpu.memory_space<vmem>>, vector<1x128x16xbf16>
    %23 = vector.shape_cast %22 : vector<1x128x16xbf16> to vector<128x16xbf16>
    %cst_15 = arith.constant dense<0.000000e+00> : vector<64x16xf32>
    %24 = tpu.matmul %21, %23, %cst_15 {dimension_numbers = #tpu.dot_dimension_numbers<[1], [0], [0], [1], [0, 0, 1, 1], [], []>} : vector<64x128xbf16>, vector<128x16xbf16>, vector<64x16xf32> -> vector<64x16xf32>
    %25 = tpu.reciprocal %20 {approx = true} : vector<64x1xf32> -> vector<64x1xf32>
    %26 = vector.broadcast %25 : vector<64x1xf32> to vector<64x16xf32>
    %27 = arith.mulf %24, %26 : vector<64x16xf32>
    %cst_16 = arith.constant 0.000000e+00 : f32
    %28 = vector.broadcast %cst_16 : f32 to vector<64x16xf32>
    %29 = arith.cmpf ogt, %27, %28 : vector<64x16xf32>
    %cst_17 = arith.constant 0.000000e+00 : f32
    %30 = vector.broadcast %cst_17 : f32 to vector<64x16xf32>
    %31 = arith.minimumf %27, %30 : vector<64x16xf32>
    %32 = math.exp %31 : vector<64x16xf32>
    %cst_18 = arith.constant 1.000000e+00 : f32
    %33 = vector.broadcast %cst_18 : f32 to vector<64x16xf32>
    %34 = arith.subf %32, %33 : vector<64x16xf32>
    %35 = arith.select %29, %27, %34 : vector<64x16xi1>, vector<64x16xf32>
    %c1 = arith.constant 1 : index
    %c0_19 = arith.constant 0 : index
    %c0_20 = arith.constant 0 : index
    %36 = vector.load %arg2[%c1, %c0_19, %c0_20] : memref<2x64x2xf32, #tpu.memory_space<vmem>>, vector<1x64x2xf32>
    %37 = vector.shape_cast %36 : vector<1x64x2xf32> to vector<64x2xf32>
    %c1_21 = arith.constant 1 : index
    %c0_22 = arith.constant 0 : index
    %c0_23 = arith.constant 0 : index
    %38 = vector.load %arg3[%c1_21, %c0_22, %c0_23] : memref<2x2x128xf32, #tpu.memory_space<vmem>>, vector<1x2x128xf32>
    %39 = vector.shape_cast %38 : vector<1x2x128xf32> to vector<2x128xf32>
    %cst_24 = arith.constant dense<0.000000e+00> : vector<64x128xf32>
    %40 = tpu.matmul %37, %39, %cst_24 {dimension_numbers = #tpu.dot_dimension_numbers<[1], [0], [0], [1], [0, 0, 1, 1], [], []>} : vector<64x2xf32>, vector<2x128xf32>, vector<64x128xf32> -> vector<64x128xf32>
    %cst_25 = arith.constant 2.000000e-01 : f32
    %41 = vector.broadcast %cst_25 : f32 to vector<64x128xf32>
    %42 = arith.mulf %41, %40 : vector<64x128xf32>
    %43 = arith.maximumf %40, %42 : vector<64x128xf32>
    %cst_26 = arith.constant -9.000000e+15 : f32
    %44 = vector.broadcast %cst_26 : f32 to vector<64x128xf32>
    %45 = arith.select %3, %43, %44 : vector<64x128xi1>, vector<64x128xf32>
    %cst_27 = arith.constant dense<0xFF800000> : vector<64xf32>
    %46 = vector.multi_reduction <maximumf>, %45, %cst_27 [1] : vector<64x128xf32> to vector<64xf32>
    %47 = vector.shape_cast %46 : vector<64xf32> to vector<64x1xf32>
    %48 = vector.broadcast %47 : vector<64x1xf32> to vector<64x128xf32>
    %49 = arith.subf %45, %48 : vector<64x128xf32>
    %50 = math.exp %49 : vector<64x128xf32>
    %cst_28 = arith.constant dense<0.000000e+00> : vector<64xf32>
    %51 = vector.multi_reduction <add>, %50, %cst_28 [1] : vector<64x128xf32> to vector<64xf32>
    %52 = vector.shape_cast %51 : vector<64xf32> to vector<64x1xf32>
    %53 = arith.truncf %50 : vector<64x128xf32> to vector<64x128xbf16>
    %c1_29 = arith.constant 1 : index
    %c0_30 = arith.constant 0 : index
    %c0_31 = arith.constant 0 : index
    %54 = vector.load %arg4[%c1_29, %c0_30, %c0_31] : memref<2x128x16xbf16, #tpu.memory_space<vmem>>, vector<1x128x16xbf16>
    %55 = vector.shape_cast %54 : vector<1x128x16xbf16> to vector<128x16xbf16>
    %cst_32 = arith.constant dense<0.000000e+00> : vector<64x16xf32>
    %56 = tpu.matmul %53, %55, %cst_32 {dimension_numbers = #tpu.dot_dimension_numbers<[1], [0], [0], [1], [0, 0, 1, 1], [], []>} : vector<64x128xbf16>, vector<128x16xbf16>, vector<64x16xf32> -> vector<64x16xf32>
    %57 = tpu.reciprocal %52 {approx = true} : vector<64x1xf32> -> vector<64x1xf32>
    %58 = vector.broadcast %57 : vector<64x1xf32> to vector<64x16xf32>
    %59 = arith.mulf %56, %58 : vector<64x16xf32>
    %cst_33 = arith.constant 0.000000e+00 : f32
    %60 = vector.broadcast %cst_33 : f32 to vector<64x16xf32>
    %61 = arith.cmpf ogt, %59, %60 : vector<64x16xf32>
    %cst_34 = arith.constant 0.000000e+00 : f32
    %62 = vector.broadcast %cst_34 : f32 to vector<64x16xf32>
    %63 = arith.minimumf %59, %62 : vector<64x16xf32>
    %64 = math.exp %63 : vector<64x16xf32>
    %cst_35 = arith.constant 1.000000e+00 : f32
    %65 = vector.broadcast %cst_35 : f32 to vector<64x16xf32>
    %66 = arith.subf %64, %65 : vector<64x16xf32>
    %67 = arith.select %61, %59, %66 : vector<64x16xi1>, vector<64x16xf32>
    %68 = tpu.concatenate %35, %67 in 1 : vector<64x16xf32>, vector<64x16xf32> -> vector<64x32xf32>
    %cst_36 = arith.constant 0.000000e+00 : f32
    %69 = vector.broadcast %cst_36 : f32 to vector<64x96xf32>
    %70 = tpu.concatenate %68, %69 in 1 : vector<64x32xf32>, vector<64x96xf32> -> vector<64x128xf32>
    %71 = arith.truncf %70 : vector<64x128xf32> to vector<64x128xbf16>
    %c0_37 = arith.constant 0 : index
    %c0_38 = arith.constant 0 : index
    %72 = vector.load %arg5[%c0_37, %c0_38] : memref<64x128xbf16, #tpu.memory_space<vmem>>, vector<64x128xbf16>
    tpu.vector_store %arg5[%c0_37, %c0_38], %71 {strides = array<i32>} : memref<64x128xbf16, #tpu.memory_space<vmem>>, vector<64x128xbf16>,
    return
  }
  func.func @transform_0(%arg0: i32) -> (i32, i32) {
    %c0_i32 = arith.constant 0 : i32
    %c0_i32_0 = arith.constant 0 : i32
    return %arg0, %c0_i32 : i32, i32
  }
  func.func @transform_1(%arg0: i32) -> (i32, i32, i32) {
    %c0_i32 = arith.constant 0 : i32
    %c0_i32_0 = arith.constant 0 : i32
    %c0_i32_1 = arith.constant 0 : i32
    return %c0_i32, %arg0, %c0_i32_0 : i32, i32, i32
  }
  func.func @transform_2(%arg0: i32) -> (i32, i32, i32) {
    %c0_i32 = arith.constant 0 : i32
    %c0_i32_0 = arith.constant 0 : i32
    %c0_i32_1 = arith.constant 0 : i32
    %c0_i32_2 = arith.constant 0 : i32
    return %c0_i32, %c0_i32_0, %c0_i32_1 : i32, i32, i32
  }
  func.func @transform_3(%arg0: i32) -> (i32, i32, i32) {
    %c0_i32 = arith.constant 0 : i32
    %c0_i32_0 = arith.constant 0 : i32
    %c0_i32_1 = arith.constant 0 : i32
    %c0_i32_2 = arith.constant 0 : i32
    return %c0_i32, %c0_i32_0, %c0_i32_1 : i32, i32, i32
  }
  func.func @transform_4(%arg0: i32) -> (i32, i32) {
    %c0_i32 = arith.constant 0 : i32
    %c0_i32_0 = arith.constant 0 : i32
    return %arg0, %c0_i32 : i32, i32
  }
}

</mosaic_0001>

<llo_original>
// kernel: tpu_custom_call.1
$region0: #{tpu_custom_call.1}
  #allocation0 [shape = 'u32[]', space=smem, size = 0x4, offset = 0x4, fixed_abs, tag = 'smem constant byte address 0x4 - core index']
  #allocation1 [shape = 'u32[144,128]{1,0:T(1,128)}', space=vmem, size = 0x12000, scoped, tag = 'internal scratch']
  %s0 = inlined_call_operand.vmem [shape: s8[128,128], index: 0, kind: input, shape index: {}]
  %s1 = inlined_call_operand.vmem [shape: f32[2,128,2], index: 1, kind: input, shape index: {}]
  %s2 = inlined_call_operand.vmem [shape: f32[2,2,128], index: 2, kind: input, shape index: {}]
  %s3 = inlined_call_operand.vmem [shape: bf16[2,128,16], index: 3, kind: input, shape index: {}]
  %s4 = inlined_call_operand.hbm [shape: bf16[128,128], index: 4, kind: output, shape index: {}]
  %s5 = sld [smem:[#allocation0]]
  $region87: #{tpu_custom_call.1} parent=0
    _
  %s7 = ssub.s32 1, %s5
  %s8 = scalar_select 0, %s7, %s5
  $region1: #{tpu_custom_call.1} parent=0
    #allocation2 [shape = 'u8[131072]{0}', space=vmem, size = 0x20000, scoped, tag = 'input window, operand 1']
    #allocation3 [shape = 'u8[32768]{0}', space=vmem, size = 0x8000, scoped, tag = 'output window, operand 0']
    #allocation4 [shape = 's32[2]{0}', space=sflag, size = 0x8, scoped, tag = 'scoped memory for tpu_custom_call.1']
    %9 = vsyncpa [#allocation4], 0
    %s10 = scalar_lea.sflag [#allocation4], 1
    %11 = vsyncpa %s10, 0
    loop: start=0, step=1, limit=4
    $region2: #{tpu_custom_call.1} parent=1 // loop_pre_header
      _
    $region3: #{tpu_custom_call.1} parent=1 // loop_header
      %s13 = sphi 0, %s17
      %p14 = scmp.ge.s32.totalorder %s13, 4
      %s23 = sphi 0, %s25
      %s26 = sphi 0, %s23
      %s27 = sphi 0, %s26
      %s43 = sphi 0, %s27
      %s49 = sphi 0, %s51
      %s52 = sphi 0, %s49
      %s53 = sphi 0, %s52
      %s69 = sphi 0, %s53
      %s73 = sphi 0, %s73
      %s75 = sphi 0, %s73
      %s76 = sphi 0, %s75
      %s90 = sphi 0, %s76
      %s94 = sphi 0, %s94
      %s96 = sphi 0, %s94
      %s97 = sphi 0, %s96
      %s111 = sphi 0, %s97
      %s117 = sphi 0, %s119
      %s120 = sphi 0, %s117
      %s121 = sphi 0, %s120
      %s137 = sphi 0, %s121
    $region4: #{tpu_custom_call.1} parent=1 // loop_header_branch
      %16 = sbr.rel (%p14) target = $region8
    $region5: #{tpu_custom_call.1} parent=1 // loop_body
      %s18 = ssub.s32 %s13, 1
      %s19 = ssub.s32 %s13, 2
      %s20 = sadd.s32 %s13, 1
      %s21 = ssub.s32 %s13, %s20
      %p22 = scmp.eq.s32.totalorder %s21, 0
      %s24 = sadd.s32 %s23, 1
      %s25 = scalar_select %p22, %s23, %s24
      %p28 = pneg %p22
      %p29 = scmp.eq.s32.totalorder %s13, 1
      %p30 = por %p28, %p29
      %p31 = scmp.ne.s32.totalorder %s23, %s26
      %p32 = scmp.eq.s32.totalorder %s13, 0
      %p33 = por %p31, %p32
      %p34 = scmp.ne.s32.totalorder %s23, %s26
      %p35 = scmp.eq.s32.totalorder %s18, 1
      %p36 = por %p34, %p35
      %p37 = scmp.ne.s32.totalorder %s26, %s27
      %p38 = scmp.eq.s32.totalorder %s18, 0
      %p39 = por %p37, %p38
      %p40 = scmp.ne.s32.totalorder %s26, %s27
      %p41 = scmp.eq.s32.totalorder %s19, 1
      %p42 = por %p40, %p41
      %p44 = scmp.ne.s32.totalorder %s27, %s43
      %p45 = scmp.eq.s32.totalorder %s19, 0
      %p46 = por %p44, %p45
      %s47 = ssub.s32 %s13, %s20
      %p48 = scmp.eq.s32.totalorder %s47, 0
      %s50 = sadd.s32 %s49, 1
      %s51 = scalar_select %p48, %s49, %s50
      %p54 = pneg %p48
      %p55 = scmp.eq.s32.totalorder %s13, 1
      %p56 = por %p54, %p55
      %p57 = scmp.ne.s32.totalorder %s49, %s52
      %p58 = scmp.eq.s32.totalorder %s13, 0
      %p59 = por %p57, %p58
      %p60 = scmp.ne.s32.totalorder %s49, %s52
      %p61 = scmp.eq.s32.totalorder %s18, 1
      %p62 = por %p60, %p61
      %p63 = scmp.ne.s32.totalorder %s52, %s53
      %p64 = scmp.eq.s32.totalorder %s18, 0
      %p65 = por %p63, %p64
      %p66 = scmp.ne.s32.totalorder %s52, %s53
      %p67 = scmp.eq.s32.totalorder %s19, 1
      %p68 = por %p66, %p67
      %p70 = scmp.ne.s32.totalorder %s53, %s69
      %p71 = scmp.eq.s32.totalorder %s19, 0
      %p72 = por %p70, %p71
      %s74 = sadd.s32 %s73, 1
      %p77 = scmp.eq.s32.totalorder %s13, 1
      %p78 = scmp.ne.s32.totalorder %s73, %s75
      %p79 = scmp.eq.s32.totalorder %s13, 0
      %p80 = por %p78, %p79
      %p81 = scmp.ne.s32.totalorder %s73, %s75
      %p82 = scmp.eq.s32.totalorder %s18, 1
      %p83 = por %p81, %p82
      %p84 = scmp.ne.s32.totalorder %s75, %s76
      %p85 = scmp.eq.s32.totalorder %s18, 0
      %p86 = por %p84, %p85
      %p87 = scmp.ne.s32.totalorder %s75, %s76
      %p88 = scmp.eq.s32.totalorder %s19, 1
      %p89 = por %p87, %p88
      %p91 = scmp.ne.s32.totalorder %s76, %s90
      %p92 = scmp.eq.s32.totalorder %s19, 0
      %p93 = por %p91, %p92
      %s95 = sadd.s32 %s94, 1
      %p98 = scmp.eq.s32.totalorder %s13, 1
      %p99 = scmp.ne.s32.totalorder %s94, %s96
      %p100 = scmp.eq.s32.totalorder %s13, 0
      %p101 = por %p99, %p100
      %p102 = scmp.ne.s32.totalorder %s94, %s96
      %p103 = scmp.eq.s32.totalorder %s18, 1
      %p104 = por %p102, %p103
      %p105 = scmp.ne.s32.totalorder %s96, %s97
      %p106 = scmp.eq.s32.totalorder %s18, 0
      %p107 = por %p105, %p106
      %p108 = scmp.ne.s32.totalorder %s96, %s97
      %p109 = scmp.eq.s32.totalorder %s19, 1
      %p110 = por %p108, %p109
      %p112 = scmp.ne.s32.totalorder %s97, %s111
      %p113 = scmp.eq.s32.totalorder %s19, 0
      %p114 = por %p112, %p113
      %s115 = ssub.s32 %s13, %s20
      %p116 = scmp.eq.s32.totalorder %s115, 0
      %s118 = sadd.s32 %s117, 1
      %s119 = scalar_select %p116, %s117, %s118
      %p122 = pneg %p116
      %p123 = scmp.eq.s32.totalorder %s13, 1
      %p124 = por %p122, %p123
      %p125 = scmp.ne.s32.totalorder %s117, %s120
      %p126 = scmp.eq.s32.totalorder %s13, 0
      %p127 = por %p125, %p126
      %p128 = scmp.ne.s32.totalorder %s117, %s120
      %p129 = scmp.eq.s32.totalorder %s18, 1
      %p130 = por %p128, %p129
      %p131 = scmp.ne.s32.totalorder %s120, %s121
      %p132 = scmp.eq.s32.totalorder %s18, 0
      %p133 = por %p131, %p132
      %p134 = scmp.ne.s32.totalorder %s120, %s121
      %p135 = scmp.eq.s32.totalorder %s19, 1
      %p136 = por %p134, %p135
      %p138 = scmp.ne.s32.totalorder %s121, %s137
      %p139 = scmp.eq.s32.totalorder %s19, 0
      %p140 = por %p138, %p139
      %p141 = scmp.le.s32.totalorder 1, %s13
      %p142 = scmp.lt.s32.totalorder %s13, 3
      %p143 = pnand %p141, %p142
      %p144 = pneg %p143
      // Predicated region
      $region9: #{tpu_custom_call.1} parent=5 // pred_check
        _
      $region10: #{tpu_custom_call.1} parent=5 // pred_check_branch
        %146 = sbr.rel (%p143) target = $region12
      $region11: #{tpu_custom_call.1} parent=5 // pred_region
        %s147 = ssub.s32 %s13, 1
        // Predicated region
        $region13: #{tpu_custom_call.1} parent=11 // pred_check
          %p148 = pneg %p86
        $region14: #{tpu_custom_call.1} parent=11 // pred_check_branch
          %150 = sbr.rel (%p148) target = $region16
        $region15: #{tpu_custom_call.1} parent=11 // pred_region
          _
        $region16: #{tpu_custom_call.1} parent=11 // pred_fallthru
          _
        // Predicated region
        $region17: #{tpu_custom_call.1} parent=11 // pred_check
          %p151 = pneg %p107
        $region18: #{tpu_custom_call.1} parent=11 // pred_check_branch
          %153 = sbr.rel (%p151) target = $region20
        $region19: #{tpu_custom_call.1} parent=11 // pred_region
          _
        $region20: #{tpu_custom_call.1} parent=11 // pred_fallthru
          _
      $region12: #{tpu_custom_call.1} parent=5 // pred_fallthru
        _
      %p154 = scmp.lt.s32.totalorder %s13, 2
      // Predicated region
      $region21: #{tpu_custom_call.1} parent=5 // pred_check
        %p155 = pneg %p154
      $region22: #{tpu_custom_call.1} parent=5 // pred_check_branch
        %157 = sbr.rel (%p155) target = $region24
      $region23: #{tpu_custom_call.1} parent=5 // pred_region
        // Predicated region
        $region25: #{tpu_custom_call.1} parent=23 // pred_check
          %p158 = pneg %p33
        $region26: #{tpu_custom_call.1} parent=23 // pred_check_branch
          %160 = sbr.rel (%p158) target = $region28
        $region27: #{tpu_custom_call.1} parent=23 // pred_region
          %s161 = smul.u32 2, %s13
          %p162 = scmp.lt.s32.totalorder %s161, 3
          %s163 = scalar_select %p162, %s161, 3
          %s164 = smul.addr %s163, 8
          %s165 = scalar_lea.vmem %s0, %s164
          %s166 = smul.u32 2, %s13
        $region28: #{tpu_custom_call.1} parent=23 // pred_fallthru
          _
        // Predicated region
        $region29: #{tpu_custom_call.1} parent=23 // pred_check
          %p167 = pneg %p59
        $region30: #{tpu_custom_call.1} parent=23 // pred_check_branch
          %169 = sbr.rel (%p167) target = $region32
        $region31: #{tpu_custom_call.1} parent=23 // pred_region
          %s170 = sand.u32 %s49, 1
          %s171 = sand.u32 %s49, 1
          %s172 = smul.addr %s171, 128
          %s173 = scalar_lea.vmem [#allocation2], %s172
          %s174 = smul.u32 8, %s13
          %s175 = smul.addr %s174, 8
          %s176 = scalar_lea.vmem %s1, %s175
          // Predicated region
          $region33: #{tpu_custom_call.1} parent=31 // pred_check
            _
          $region34: #{tpu_custom_call.1} parent=31 // pred_check_branch
            %178 = sbr.rel (0) target = $region36
          $region35: #{tpu_custom_call.1} parent=31 // pred_region
            // Predicated region
            $region37: #{tpu_custom_call.1} parent=35 // pred_check
              _
            $region38: #{tpu_custom_call.1} parent=35 // pred_check_branch
              %180 = sbr.rel (0) target = $region40
            $region39: #{tpu_custom_call.1} parent=35 // pred_region
              // Predicated region
              $region52: #{tpu_custom_call.1} parent=39 // pred_check
                _
              $region53: #{tpu_custom_call.1} parent=39 // pred_check_branch
                %226 = sbr.rel (0) target = $region55
              $region54: #{tpu_custom_call.1} parent=39 // pred_region
                loop: start=0, step=1, limit=1
                $region56: #{tpu_custom_call.1} parent=54 // loop_pre_header
                  _
                $region57: #{tpu_custom_call.1} parent=54 // loop_header
                  %s228 = sphi 0, %s232
                  %p229 = scmp.ge.s32.totalorder %s228, 1
                  %s233 = sphi %s176, %s176
                  %s234 = sphi %s173, %s173
                $region58: #{tpu_custom_call.1} parent=54 // loop_header_branch
                  %231 = sbr.rel (%p229) target = $region62
                $region59: #{tpu_custom_call.1} parent=54 // loop_body
                  %v235 = vld [vmem:[%s233] sm:$0xff]
                  %236 = vst [vmem:[%s234] sm:$0xff] %v235
                  %v237 = vld [vmem:[%s233 + $0x8] sm:$0xff]
                  %238 = vst [vmem:[%s234 + $0x8] sm:$0xff] %v237
                  %v239 = vld [vmem:[%s233 + $0x10] sm:$0xff]
                  %240 = vst [vmem:[%s234 + $0x10] sm:$0xff] %v239
                  %v241 = vld [vmem:[%s233 + $0x18] sm:$0xff]
                  %242 = vst [vmem:[%s234 + $0x18] sm:$0xff] %v241
                  %v243 = vld [vmem:[%s233 + $0x20] sm:$0xff]
                  %244 = vst [vmem:[%s234 + $0x20] sm:$0xff] %v243
                  %v245 = vld [vmem:[%s233 + $0x28] sm:$0xff]
                  %246 = vst [vmem:[%s234 + $0x28] sm:$0xff] %v245
                  %v247 = vld [vmem:[%s233 + $0x30] sm:$0xff]
                  %248 = vst [vmem:[%s234 + $0x30] sm:$0xff] %v247
                  %v249 = vld [vmem:[%s233 + $0x38] sm:$0xff]
                  %250 = vst [vmem:[%s234 + $0x38] sm:$0xff] %v249
                  %v251 = vld [vmem:[%s233 + $0x80] sm:$0xff]
                  %252 = vst [vmem:[%s234 + $0x40] sm:$0xff] %v251
                  %v253 = vld [vmem:[%s233 + $0x88] sm:$0xff]
                  %254 = vst [vmem:[%s234 + $0x48] sm:$0xff] %v253
                  %v255 = vld [vmem:[%s233 + $0x90] sm:$0xff]
                  %256 = vst [vmem:[%s234 + $0x50] sm:$0xff] %v255
                  %v257 = vld [vmem:[%s233 + $0x98] sm:$0xff]
                  %258 = vst [vmem:[%s234 + $0x58] sm:$0xff] %v257
                  %v259 = vld [vmem:[%s233 + $0xa0] sm:$0xff]
                  %260 = vst [vmem:[%s234 + $0x60] sm:$0xff] %v259
                  %v261 = vld [vmem:[%s233 + $0xa8] sm:$0xff]
                  %262 = vst [vmem:[%s234 + $0x68] sm:$0xff] %v261
                  %v263 = vld [vmem:[%s233 + $0xb0] sm:$0xff]
                  %264 = vst [vmem:[%s234 + $0x70] sm:$0xff] %v263
                  %v265 = vld [vmem:[%s233 + $0xb8] sm:$0xff]
                  %266 = vst [vmem:[%s234 + $0x78] sm:$0xff] %v265
                $region60: #{tpu_custom_call.1} parent=54 // loop_footer
                  %s232 = sadd.s32 1, %s228
                $region61: #{tpu_custom_call.1} parent=54 // loop_footer_branch
                  %227 = sbr.rel target = $region57
                $region62: #{tpu_custom_call.1} parent=54 // loop_exit
                  _
              $region55: #{tpu_custom_call.1} parent=39 // pred_fallthru
                _
              // Predicated region
              $region63: #{tpu_custom_call.1} parent=39 // pred_check
                _
              $region64: #{tpu_custom_call.1} parent=39 // pred_check_branch
                %268 = sbr.rel target = $region66
              $region65: #{tpu_custom_call.1} parent=39 // pred_region
                _
              $region66: #{tpu_custom_call.1} parent=39 // pred_fallthru
                _
            $region40: #{tpu_custom_call.1} parent=35 // pred_fallthru
              _
            // Predicated region
            $region41: #{tpu_custom_call.1} parent=35 // pred_check
              _
            $region42: #{tpu_custom_call.1} parent=35 // pred_check_branch
              %182 = sbr.rel target = $region44
            $region43: #{tpu_custom_call.1} parent=35 // pred_region
              %s184 = ssub.s32 256, 1
              loop: start=0, step=1, limit=1
              $region45: #{tpu_custom_call.1} parent=43 // loop_pre_header
                _
              $region46: #{tpu_custom_call.1} parent=43 // loop_header
                %s186 = sphi 0, %s190
                %p187 = scmp.ge.s32.totalorder %s186, 1
                %s191 = sphi %s176, %s176
                %s192 = sphi %s173, %s173
              $region47: #{tpu_custom_call.1} parent=43 // loop_header_branch
                %189 = sbr.rel (%p187) target = $region51
              $region48: #{tpu_custom_call.1} parent=43 // loop_body
                %v193 = vld [vmem:[%s191] sm:%s184]
                %194 = vst [vmem:[%s192] sm:%s184] %v193
                %v195 = vld [vmem:[%s191 + $0x8] sm:%s184]
                %196 = vst [vmem:[%s192 + $0x8] sm:%s184] %v195
                %v197 = vld [vmem:[%s191 + $0x10] sm:%s184]
                %198 = vst [vmem:[%s192 + $0x10] sm:%s184] %v197
                %v199 = vld [vmem:[%s191 + $0x18] sm:%s184]
                %200 = vst [vmem:[%s192 + $0x18] sm:%s184] %v199
                %v201 = vld [vmem:[%s191 + $0x20] sm:%s184]
                %202 = vst [vmem:[%s192 + $0x20] sm:%s184] %v201
                %v203 = vld [vmem:[%s191 + $0x28] sm:%s184]
                %204 = vst [vmem:[%s192 + $0x28] sm:%s184] %v203
                %v205 = vld [vmem:[%s191 + $0x30] sm:%s184]
                %206 = vst [vmem:[%s192 + $0x30] sm:%s184] %v205
                %v207 = vld [vmem:[%s191 + $0x38] sm:%s184]
                %208 = vst [vmem:[%s192 + $0x38] sm:%s184] %v207
                %v209 = vld [vmem:[%s191 + $0x80] sm:%s184]
                %210 = vst [vmem:[%s192 + $0x40] sm:%s184] %v209
                %v211 = vld [vmem:[%s191 + $0x88] sm:%s184]
                %212 = vst [vmem:[%s192 + $0x48] sm:%s184] %v211
                %v213 = vld [vmem:[%s191 + $0x90] sm:%s184]
                %214 = vst [vmem:[%s192 + $0x50] sm:%s184] %v213
                %v215 = vld [vmem:[%s191 + $0x98] sm:%s184]
                %216 = vst [vmem:[%s192 + $0x58] sm:%s184] %v215
                %v217 = vld [vmem:[%s191 + $0xa0] sm:%s184]
                %218 = vst [vmem:[%s192 + $0x60] sm:%s184] %v217
                %v219 = vld [vmem:[%s191 + $0xa8] sm:%s184]
                %220 = vst [vmem:[%s192 + $0x68] sm:%s184] %v219
                %v221 = vld [vmem:[%s191 + $0xb0] sm:%s184]
                %222 = vst [vmem:[%s192 + $0x70] sm:%s184] %v221
                %v223 = vld [vmem:[%s191 + $0xb8] sm:%s184]
                %224 = vst [vmem:[%s192 + $0x78] sm:%s184] %v223
              $region49: #{tpu_custom_call.1} parent=43 // loop_footer
                %s190 = sadd.s32 1, %s186
              $region50: #{tpu_custom_call.1} parent=43 // loop_footer_branch
                %185 = sbr.rel target = $region46
              $region51: #{tpu_custom_call.1} parent=43 // loop_exit
                _
            $region44: #{tpu_custom_call.1} parent=35 // pred_fallthru
              _
          $region36: #{tpu_custom_call.1} parent=31 // pred_fallthru
            _
          %269 = vnop
        $region32: #{tpu_custom_call.1} parent=23 // pred_fallthru
          _
      $region24: #{tpu_custom_call.1} parent=5 // pred_fallthru
        _
      %p270 = scmp.le.s32.totalorder 1, %s13
      %p271 = scmp.lt.s32.totalorder %s13, 3
      %p272 = pnand %p270, %p271
      %p273 = pneg %p272
      // Predicated region
      $region67: #{tpu_custom_call.1} parent=5 // pred_check
        _
      $region68: #{tpu_custom_call.1} parent=5 // pred_check_branch
        %275 = sbr.rel (%p272) target = $region70
      $region69: #{tpu_custom_call.1} parent=5 // pred_region
        %s276 = ssub.s32 %s13, 1
        %s277 = sand.u32 %s52, 1
        %s278 = sand.u32 %s52, 1
        %s279 = smul.addr %s278, 128
        %s280 = scalar_lea.vmem [#allocation2], %s279
        // Predicated region
        $region71: #{tpu_custom_call.1} parent=69 // pred_check
          %p281 = pneg %p65
        $region72: #{tpu_custom_call.1} parent=69 // pred_check_branch
          %283 = sbr.rel (%p281) target = $region74
        $region73: #{tpu_custom_call.1} parent=69 // pred_region
          _
        $region74: #{tpu_custom_call.1} parent=69 // pred_fallthru
          _
        %s284 = smul.u32 2, %s18
        %p285 = scmp.lt.s32.totalorder %s284, 3
        %s286 = scalar_select %p285, %s284, 3
        %s287 = smul.addr %s286, 8
        %s288 = scalar_lea.vmem %s0, %s287
        %p289 = pneg %p39
        %p290 = pneg %p36
        %s291 = sand.u32 %s52, 1
        %s292 = sand.u32 %s52, 1
        %s293 = smul.addr %s292, 128
        %s294 = scalar_lea.vmem [#allocation2], %s293
        %p295 = pneg %p65
        %p296 = pneg %p62
        %p297 = pneg %p86
        %p298 = pneg %p83
        %p299 = pneg %p107
        %p300 = pneg %p104
        %p301 = pneg %p133
        %p302 = pneg %p130
        %s303 = sand.u32 %s120, 1
        %s304 = scalar_lea.sflag [#allocation4], %s303
        %s305 = sand.u32 %s120, 1
        %s306 = smul.addr %s305, 32
        %s307 = scalar_lea.vmem [#allocation3], %s306
        %s308 = smul.u32 2, %s18
        %p309 = scmp.lt.s32.totalorder %s308, 3
        %s310 = scalar_select %p309, %s308, 3
        %s311 = smul.addr %s310, 8
        %s312 = scalar_lea.vmem %s0, %s311
        %s313 = smul.u32 2, %s18
        %s314 = smul.u32 8, %s18
        %s315 = smul.u32 8, %s18
        %v317 = vld [vmem:[%s312] sm:$0xff]
        %v318 = vld [vmem:[%s312 + $0x8] sm:$0xff]
        %v319 = vunpack.c.0.s8 %v317
        %v320 = vunpack.c.1.s8 %v317
        %v321 = vunpack.c.2.s8 %v317
        %v322 = vunpack.c.3.s8 %v317
        %v323 = vunpack.c.0.s8 %v318
        %v324 = vunpack.c.1.s8 %v318
        %v325 = vunpack.c.2.s8 %v318
        %v326 = vunpack.c.3.s8 %v318
        %v327 = vcvt.s32.f32 %v319
        %v328 = vcvt.s32.f32 %v320
        %v329 = vcvt.s32.f32 %v321
        %v330 = vcvt.s32.f32 %v322
        %v331 = vcvt.s32.f32 %v323
        %v332 = vcvt.s32.f32 %v324
        %v333 = vcvt.s32.f32 %v325
        %v334 = vcvt.s32.f32 %v326
        %vm335 = vcmp.gt.f32.partialorder %v327, 0.0
        %vm336 = vcmp.gt.f32.partialorder %v328, 0.0
        %vm337 = vcmp.gt.f32.partialorder %v329, 0.0
        %vm338 = vcmp.gt.f32.partialorder %v330, 0.0
        %vm339 = vcmp.gt.f32.partialorder %v331, 0.0
        %vm340 = vcmp.gt.f32.partialorder %v332, 0.0
        %vm341 = vcmp.gt.f32.partialorder %v333, 0.0
        %vm342 = vcmp.gt.f32.partialorder %v334, 0.0
        %v343 = vld [vmem:[%s280] sm:$0xff]
        %v344 = vld [vmem:[%s280 + $0x8] sm:$0xff]
        %v345 = vld [vmem:[%s280 + $0x10] sm:$0xff]
        %v346 = vld [vmem:[%s280 + $0x18] sm:$0xff]
        %v347 = vld [vmem:[%s280 + $0x20] sm:$0xff]
        %v348 = vld [vmem:[%s280 + $0x28] sm:$0xff]
        %v349 = vld [vmem:[%s280 + $0x30] sm:$0xff]
        %v350 = vld [vmem:[%s280 + $0x38] sm:$0xff]
        %v351 = vld [vmem:[%s2] sm:$0x3]
        %vm352 = vcmask 15360
        %v354 = vsel %vm352, %v343, 0
        %v357 = vsel %vm352, %v344, 0
        %v360 = vsel %vm352, %v345, 0
        %v363 = vsel %vm352, %v346, 0
        %v366 = vsel %vm352, %v347, 0
        %v369 = vsel %vm352, %v348, 0
        %v372 = vsel %vm352, %v349, 0
        %v375 = vsel %vm352, %v350, 0
        %vm377 = vcmask 1041408
        %v379 = vsel %vm377, %v351, 0
        %381 = vmatprep.subr.mxu0 0.0
        %382 = vmatpush1.msra.mxu0 0.0
        %383 = vmatprep.subr.mxu0 0.0
        %384 = vmatpush1.msra.mxu0 0.0
        %385 = vmatprep.subr.mxu0 0.0
        %386 = vmatpush1.msra.mxu0 0.0
        %387 = vmatprep.subr.mxu0 0.0
        %388 = vmatpush1.msra.mxu0 0.0
        %389 = vmatprep.subr.mxu0 0.0
        %390 = vmatpush1.msra.mxu0 0.0
        %391 = vmatprep.subr.mxu0 0.0
        %392 = vmatpush1.msra.mxu0 0.0
        %393 = vmatprep.subr.mxu0 0.0
        %394 = vmatpush1.msra.mxu0 0.0
        %395 = vmatprep.subr.mxu0 0.0
        %396 = vmatpush1.msra.mxu0 0.0
        %397 = vmatprep.subr.mxu0 0.0
        %398 = vmatpush1.msra.mxu0 0.0
        %399 = vmatprep.subr.mxu0 0.0
        %400 = vmatpush1.msra.mxu0 0.0
        %401 = vmatprep.subr.mxu0 0.0
        %402 = vmatpush1.msra.mxu0 0.0
        %403 = vmatprep.subr.mxu0 0.0
        %404 = vmatpush1.msra.mxu0 0.0
        %405 = vmatprep.subr.mxu0 0.0
        %406 = vmatpush1.msra.mxu0 0.0
        %407 = vmatprep.subr.mxu0 0.0
        %408 = vmatpush1.msra.mxu0 0.0
        %409 = vmatprep.subr.mxu0 0.0
        %410 = vmatpush1.msra.mxu0 0.0
        %411 = vmatprep.subr.mxu0 0.0
        %412 = vmatpush1.msra.mxu0 %v379
        %413 = vmatprep.subr.mxu0 0.0
        %414 = vmatpush2.msra.mxu0 0.0
        %415 = vmatprep.subr.mxu0 0.0
        %416 = vmatpush2.msra.mxu0 0.0
        %417 = vmatprep.subr.mxu0 0.0
        %418 = vmatpush2.msra.mxu0 0.0
        %419 = vmatprep.subr.mxu0 0.0
        %420 = vmatpush2.msra.mxu0 0.0
        %421 = vmatprep.subr.mxu0 0.0
        %422 = vmatpush2.msra.mxu0 0.0
        %423 = vmatprep.subr.mxu0 0.0
        %424 = vmatpush2.msra.mxu0 0.0
        %425 = vmatprep.subr.mxu0 0.0
        %426 = vmatpush2.msra.mxu0 0.0
        %427 = vmatprep.subr.mxu0 0.0
        %428 = vmatpush2.msra.mxu0 0.0
        %429 = vmatprep.subr.mxu0 0.0
        %430 = vmatpush2.msra.mxu0 0.0
        %431 = vmatprep.subr.mxu0 0.0
        %432 = vmatpush2.msra.mxu0 0.0
        %433 = vmatprep.subr.mxu0 0.0
        %434 = vmatpush2.msra.mxu0 0.0
        %435 = vmatprep.subr.mxu0 0.0
        %436 = vmatpush2.msra.mxu0 0.0
        %437 = vmatprep.subr.mxu0 0.0
        %438 = vmatpush2.msra.mxu0 0.0
        %439 = vmatprep.subr.mxu0 0.0
        %440 = vmatpush2.msra.mxu0 0.0
        %441 = vmatprep.subr.mxu0 0.0
        %442 = vmatpush2.msra.mxu0 0.0
        %443 = vmatprep.subr.mxu0 0.0
        %444 = vmatpush2.msra.mxu0 0.0
        %445 = vmatprep.mubr.f32.mxu0 0.0
        %446 = vmatmul.mubr.f32.gmra.mxu0 %v354
        %v447 = vpop.f32.mrf.mxu0
        %v448 = vadd.f32 0.0, %v447
        %v449 = vpop.f32.mrf.mxu0
        %450 = vmatprep.mubr.f32.mxu0 0.0
        %451 = vmatmul.mubr.f32.gmra.mxu0 %v357
        %v452 = vpop.f32.mrf.mxu0
        %v453 = vadd.f32 0.0, %v452
        %v454 = vpop.f32.mrf.mxu0
        %455 = vmatprep.mubr.f32.mxu0 0.0
        %456 = vmatmul.mubr.f32.gmra.mxu0 %v360
        %v457 = vpop.f32.mrf.mxu0
        %v458 = vadd.f32 0.0, %v457
        %v459 = vpop.f32.mrf.mxu0
        %460 = vmatprep.mubr.f32.mxu0 0.0
        %461 = vmatmul.mubr.f32.gmra.mxu0 %v363
        %v462 = vpop.f32.mrf.mxu0
        %v463 = vadd.f32 0.0, %v462
        %v464 = vpop.f32.mrf.mxu0
        %465 = vmatprep.mubr.f32.mxu0 0.0
        %466 = vmatmul.mubr.f32.gmra.mxu0 %v366
        %v467 = vpop.f32.mrf.mxu0
        %v468 = vadd.f32 0.0, %v467
        %v469 = vpop.f32.mrf.mxu0
        %470 = vmatprep.mubr.f32.mxu0 0.0
        %471 = vmatmul.mubr.f32.gmra.mxu0 %v369
        %v472 = vpop.f32.mrf.mxu0
        %v473 = vadd.f32 0.0, %v472
        %v474 = vpop.f32.mrf.mxu0
        %475 = vmatprep.mubr.f32.mxu0 0.0
        %476 = vmatmul.mubr.f32.gmra.mxu0 %v372
        %v477 = vpop.f32.mrf.mxu0
        %v478 = vadd.f32 0.0, %v477
        %v479 = vpop.f32.mrf.mxu0
        %480 = vmatprep.mubr.f32.mxu0 0.0
        %481 = vmatmul.mubr.f32.gmra.mxu0 %v375
        %v482 = vpop.f32.mrf.mxu0
        %v483 = vadd.f32 0.0, %v482
        %v484 = vpop.f32.mrf.mxu0
        %485 = vdwg.mxu0
        %v486 = vmul.f32 %v448, 0.2
        %v487 = vmul.f32 %v453, 0.2
        %v488 = vmul.f32 %v458, 0.2
        %v489 = vmul.f32 %v463, 0.2
        %v490 = vmul.f32 %v468, 0.2
        %v491 = vmul.f32 %v473, 0.2
        %v492 = vmul.f32 %v478, 0.2
        %v493 = vmul.f32 %v483, 0.2
        %v494 = vmax.f32 %v448, %v486
        %v495 = vmax.f32 %v453, %v487
        %v496 = vmax.f32 %v458, %v488
        %v497 = vmax.f32 %v463, %v489
        %v498 = vmax.f32 %v468, %v490
        %v499 = vmax.f32 %v473, %v491
        %v500 = vmax.f32 %v478, %v492
        %v501 = vmax.f32 %v483, %v493
        %v502 = vsel %vm335, %v494, -9e+15
        %v503 = vsel %vm336, %v495, -9e+15
        %v504 = vsel %vm337, %v496, -9e+15
        %v505 = vsel %vm338, %v497, -9e+15
        %v506 = vsel %vm339, %v498, -9e+15
        %v507 = vsel %vm340, %v499, -9e+15
        %v508 = vsel %vm341, %v500, -9e+15
        %v509 = vsel %vm342, %v501, -9e+15
        %510 = vmax.xlane.f32.xlu0 %v502
        %v511 = vpop.xlane.xlu0 %510
        %512 = vmax.xlane.f32.xlu0 %v503
        %v513 = vpop.xlane.xlu0 %512
        %514 = vmax.xlane.f32.xlu0 %v504
        %v515 = vpop.xlane.xlu0 %514
        %516 = vmax.xlane.f32.xlu0 %v505
        %v517 = vpop.xlane.xlu0 %516
        %518 = vmax.xlane.f32.xlu0 %v506
        %v519 = vpop.xlane.xlu0 %518
        %520 = vmax.xlane.f32.xlu0 %v507
        %v521 = vpop.xlane.xlu0 %520
        %522 = vmax.xlane.f32.xlu0 %v508
        %v523 = vpop.xlane.xlu0 %522
        %524 = vmax.xlane.f32.xlu0 %v509
        %v525 = vpop.xlane.xlu0 %524
        %v526 = vsub.f32 %v502, %v511
        %v527 = vsub.f32 %v503, %v513
        %v528 = vsub.f32 %v504, %v515
        %v529 = vsub.f32 %v505, %v517
        %v530 = vsub.f32 %v506, %v519
        %v531 = vsub.f32 %v507, %v521
        %v532 = vsub.f32 %v508, %v523
        %v533 = vsub.f32 %v509, %v525
        %v534 = vmul.f32 %v526, 1.442695
        %v535 = vpow.pop %v534
        %v536 = vmul.f32 %v527, 1.442695
        %v537 = vpow.pop %v536
        %v538 = vmul.f32 %v528, 1.442695
        %v539 = vpow.pop %v538
        %v540 = vmul.f32 %v529, 1.442695
        %v541 = vpow.pop %v540
        %v542 = vmul.f32 %v530, 1.442695
        %v543 = vpow.pop %v542
        %v544 = vmul.f32 %v531, 1.442695
        %v545 = vpow.pop %v544
        %v546 = vmul.f32 %v532, 1.442695
        %v547 = vpow.pop %v546
        %v548 = vmul.f32 %v533, 1.442695
        %v549 = vpow.pop %v548
        %550 = vadd.xlane.f32.xlu0 %v535
        %v551 = vpop.xlane.xlu0 %550
        %552 = vadd.xlane.f32.xlu0 %v537
        %v553 = vpop.xlane.xlu0 %552
        %554 = vadd.xlane.f32.xlu0 %v539
        %v555 = vpop.xlane.xlu0 %554
        %556 = vadd.xlane.f32.xlu0 %v541
        %v557 = vpop.xlane.xlu0 %556
        %558 = vadd.xlane.f32.xlu0 %v543
        %v559 = vpop.xlane.xlu0 %558
        %560 = vadd.xlane.f32.xlu0 %v545
        %v561 = vpop.xlane.xlu0 %560
        %562 = vadd.xlane.f32.xlu0 %v547
        %v563 = vpop.xlane.xlu0 %562
        %564 = vadd.xlane.f32.xlu0 %v549
        %v565 = vpop.xlane.xlu0 %564
        %v566 = vpack.c.bf16 %v537, %v535
        %v567 = vpack.c.bf16 %v541, %v539
        %v568 = vpack.c.bf16 %v545, %v543
        %v569 = vpack.c.bf16 %v549, %v547
        %v570 = vld [vmem:[%s3] sm:$0xf]
        %v571 = vld [vmem:[%s3 + $0x4] sm:$0xf]
        %v572 = vld [vmem:[%s3 + $0x8] sm:$0xf]
        %v573 = vld [vmem:[%s3 + $0xc] sm:$0xf]
        %v574 = vld [vmem:[%s3 + $0x10] sm:$0xf]
        %v575 = vld [vmem:[%s3 + $0x14] sm:$0xf]
        %v576 = vld [vmem:[%s3 + $0x18] sm:$0xf]
        %v577 = vld [vmem:[%s3 + $0x1c] sm:$0xf]
        %v578 = vld [vmem:[%s3 + $0x20] sm:$0xf]
        %v579 = vld [vmem:[%s3 + $0x24] sm:$0xf]
        %v580 = vld [vmem:[%s3 + $0x28] sm:$0xf]
        %v581 = vld [vmem:[%s3 + $0x2c] sm:$0xf]
        %v582 = vld [vmem:[%s3 + $0x30] sm:$0xf]
        %v583 = vld [vmem:[%s3 + $0x34] sm:$0xf]
        %v584 = vld [vmem:[%s3 + $0x38] sm:$0xf]
        %v585 = vld [vmem:[%s3 + $0x3c] sm:$0xf]
        %v602 = vunpack.c.l.b16 %v570
        %v603 = vunpack.c.l.b16 %v571
        %v604 = vunpack.c.l.b16 %v572
        %v605 = vunpack.c.l.b16 %v573
        %v606 = vunpack.c.l.b16 %v574
        %v607 = vunpack.c.l.b16 %v575
        %v608 = vunpack.c.l.b16 %v576
        %v609 = vunpack.c.l.b16 %v577
        %v610 = vunpack.c.l.b16 %v578
        %v611 = vunpack.c.l.b16 %v579
        %v612 = vunpack.c.l.b16 %v580
        %v613 = vunpack.c.l.b16 %v581
        %v614 = vunpack.c.l.b16 %v582
        %v615 = vunpack.c.l.b16 %v583
        %v616 = vunpack.c.l.b16 %v584
        %v617 = vunpack.c.l.b16 %v585
        %v618 = vpack.c.b16 %v603, %v602
        %v619 = vpack.c.b16 %v605, %v604
        %v620 = vpack.c.b16 %v607, %v606
        %v621 = vpack.c.b16 %v609, %v608
        %v622 = vpack.c.b16 %v611, %v610
        %v623 = vpack.c.b16 %v613, %v612
        %v624 = vpack.c.b16 %v615, %v614
        %v625 = vpack.c.b16 %v617, %v616
        %634 = vmatprep.subr.bf16.mxu0 0
        %635 = vmatpush1.bf16.msra.mxu0 %v625
        %636 = vmatprep.subr.bf16.mxu0 0
        %637 = vmatpush1.bf16.msra.mxu0 %v624
        %638 = vmatprep.subr.bf16.mxu0 0
        %639 = vmatpush1.bf16.msra.mxu0 %v623
        %640 = vmatprep.subr.bf16.mxu0 0
        %641 = vmatpush1.bf16.msra.mxu0 %v622
        %642 = vmatprep.subr.bf16.mxu0 0
        %643 = vmatpush1.bf16.msra.mxu0 %v621
        %644 = vmatprep.subr.bf16.mxu0 0
        %645 = vmatpush1.bf16.msra.mxu0 %v620
        %646 = vmatprep.subr.bf16.mxu0 0
        %647 = vmatpush1.bf16.msra.mxu0 %v619
        %648 = vmatprep.subr.bf16.mxu0 0
        %649 = vmatpush1.bf16.msra.mxu0 %v618
        %650 = vmatprep.subr.bf16.mxu0 0
        %651 = vmatpush2.bf16.msra.mxu0 0
        %652 = vmatprep.subr.bf16.mxu0 0
        %653 = vmatpush2.bf16.msra.mxu0 0
        %654 = vmatprep.subr.bf16.mxu0 0
        %655 = vmatpush2.bf16.msra.mxu0 0
        %656 = vmatprep.subr.bf16.mxu0 0
        %657 = vmatpush2.bf16.msra.mxu0 0
        %658 = vmatprep.subr.bf16.mxu0 0
        %659 = vmatpush2.bf16.msra.mxu0 0
        %660 = vmatprep.subr.bf16.mxu0 0
        %661 = vmatpush2.bf16.msra.mxu0 0
        %662 = vmatprep.subr.bf16.mxu0 0
        %663 = vmatpush2.bf16.msra.mxu0 0
        %664 = vmatprep.subr.bf16.mxu0 0
        %665 = vmatpush2.bf16.msra.mxu0 0
        %666 = vmatprep.mubr.bf16.mxu0 0
        %667 = vmatmul.mubr.bf16.gmra.mxu0 %v566
        %v668 = vpop.f32.mrf.mxu0
        %v669 = vadd.f32 0.0, %v668
        %v670 = vpop.f32.mrf.mxu0
        %v671 = vpop.f32.mrf.mxu0
        %v672 = vadd.f32 0.0, %v671
        %v673 = vpop.f32.mrf.mxu0
        %674 = vmatprep.mubr.bf16.mxu0 0
        %675 = vmatmul.mubr.bf16.gmra.mxu0 %v567
        %v676 = vpop.f32.mrf.mxu0
        %v677 = vadd.f32 0.0, %v676
        %v678 = vpop.f32.mrf.mxu0
        %v679 = vpop.f32.mrf.mxu0
        %v680 = vadd.f32 0.0, %v679
        %v681 = vpop.f32.mrf.mxu0
        %682 = vmatprep.mubr.bf16.mxu0 0
        %683 = vmatmul.mubr.bf16.gmra.mxu0 %v568
        %v684 = vpop.f32.mrf.mxu0
        %v685 = vadd.f32 0.0, %v684
        %v686 = vpop.f32.mrf.mxu0
        %v687 = vpop.f32.mrf.mxu0
        %v688 = vadd.f32 0.0, %v687
        %v689 = vpop.f32.mrf.mxu0
        %690 = vmatprep.mubr.bf16.mxu0 0
        %691 = vmatmul.mubr.bf16.gmra.mxu0 %v569
        %v692 = vpop.f32.mrf.mxu0
        %v693 = vadd.f32 0.0, %v692
        %v694 = vpop.f32.mrf.mxu0
        %v695 = vpop.f32.mrf.mxu0
        %v696 = vadd.f32 0.0, %v695
        %v697 = vpop.f32.mrf.mxu0
        %698 = vdwg.mxu0
        %v699 = vrcp.pop %v551
        %v700 = vrcp.pop %v553
        %v701 = vrcp.pop %v555
        %v702 = vrcp.pop %v557
        %v703 = vrcp.pop %v559
        %v704 = vrcp.pop %v561
        %v705 = vrcp.pop %v563
        %v706 = vrcp.pop %v565
        %v707 = vmul.f32 %v669, %v699
        %v708 = vmul.f32 %v672, %v700
        %v709 = vmul.f32 %v677, %v701
        %v710 = vmul.f32 %v680, %v702
        %v711 = vmul.f32 %v685, %v703
        %v712 = vmul.f32 %v688, %v704
        %v713 = vmul.f32 %v693, %v705
        %v714 = vmul.f32 %v696, %v706
        %vm715 = vcmp.gt.f32.partialorder %v707, 0.0
        %vm716 = vcmp.gt.f32.partialorder %v708, 0.0
        %vm717 = vcmp.gt.f32.partialorder %v709, 0.0
        %vm718 = vcmp.gt.f32.partialorder %v710, 0.0
        %vm719 = vcmp.gt.f32.partialorder %v711, 0.0
        %vm720 = vcmp.gt.f32.partialorder %v712, 0.0
        %vm721 = vcmp.gt.f32.partialorder %v713, 0.0
        %vm722 = vcmp.gt.f32.partialorder %v714, 0.0
        %v723 = vmin.f32 %v707, 0.0
        %v724 = vmin.f32 %v708, 0.0
        %v725 = vmin.f32 %v709, 0.0
        %v726 = vmin.f32 %v710, 0.0
        %v727 = vmin.f32 %v711, 0.0
        %v728 = vmin.f32 %v712, 0.0
        %v729 = vmin.f32 %v713, 0.0
        %v730 = vmin.f32 %v714, 0.0
        %v731 = vmul.f32 %v723, 1.442695
        %v732 = vpow.pop %v731
        %v733 = vmul.f32 %v724, 1.442695
        %v734 = vpow.pop %v733
        %v735 = vmul.f32 %v725, 1.442695
        %v736 = vpow.pop %v735
        %v737 = vmul.f32 %v726, 1.442695
        %v738 = vpow.pop %v737
        %v739 = vmul.f32 %v727, 1.442695
        %v740 = vpow.pop %v739
        %v741 = vmul.f32 %v728, 1.442695
        %v742 = vpow.pop %v741
        %v743 = vmul.f32 %v729, 1.442695
        %v744 = vpow.pop %v743
        %v745 = vmul.f32 %v730, 1.442695
        %v746 = vpow.pop %v745
        %v747 = vsub.f32 %v732, 1.0
        %v748 = vsub.f32 %v734, 1.0
        %v749 = vsub.f32 %v736, 1.0
        %v750 = vsub.f32 %v738, 1.0
        %v751 = vsub.f32 %v740, 1.0
        %v752 = vsub.f32 %v742, 1.0
        %v753 = vsub.f32 %v744, 1.0
        %v754 = vsub.f32 %v746, 1.0
        %v755 = vsel %vm715, %v707, %v747
        %v756 = vsel %vm716, %v708, %v748
        %v757 = vsel %vm717, %v709, %v749
        %v758 = vsel %vm718, %v710, %v750
        %v759 = vsel %vm719, %v711, %v751
        %v760 = vsel %vm720, %v712, %v752
        %v761 = vsel %vm721, %v713, %v753
        %v762 = vsel %vm722, %v714, %v754
        %s763 = scalar_lea.vmem %s280, 64 [#allocation2]
        %v764 = vld [vmem:[%s763] sm:$0xff]
        %v765 = vld [vmem:[%s763 + $0x8] sm:$0xff]
        %v766 = vld [vmem:[%s763 + $0x10] sm:$0xff]
        %v767 = vld [vmem:[%s763 + $0x18] sm:$0xff]
        %v768 = vld [vmem:[%s763 + $0x20] sm:$0xff]
        %v769 = vld [vmem:[%s763 + $0x28] sm:$0xff]
        %v770 = vld [vmem:[%s763 + $0x30] sm:$0xff]
        %v771 = vld [vmem:[%s763 + $0x38] sm:$0xff]
        %s772 = scalar_lea.vmem %s2, 2
        %v773 = vld [vmem:[%s772] sm:$0x3]
        %v775 = vsel %vm352, %v764, 0
        %v778 = vsel %vm352, %v765, 0
        %v781 = vsel %vm352, %v766, 0
        %v784 = vsel %vm352, %v767, 0
        %v787 = vsel %vm352, %v768, 0
        %v790 = vsel %vm352, %v769, 0
        %v793 = vsel %vm352, %v770, 0
        %v796 = vsel %vm352, %v771, 0
        %v799 = vsel %vm377, %v773, 0
        %801 = vmatprep.subr.mxu0 0.0
        %802 = vmatpush1.msra.mxu0 0.0
        %803 = vmatprep.subr.mxu0 0.0
        %804 = vmatpush1.msra.mxu0 0.0
        %805 = vmatprep.subr.mxu0 0.0
        %806 = vmatpush1.msra.mxu0 0.0
        %807 = vmatprep.subr.mxu0 0.0
        %808 = vmatpush1.msra.mxu0 0.0
        %809 = vmatprep.subr.mxu0 0.0
        %810 = vmatpush1.msra.mxu0 0.0
        %811 = vmatprep.subr.mxu0 0.0
        %812 = vmatpush1.msra.mxu0 0.0
        %813 = vmatprep.subr.mxu0 0.0
        %814 = vmatpush1.msra.mxu0 0.0
        %815 = vmatprep.subr.mxu0 0.0
        %816 = vmatpush1.msra.mxu0 0.0
        %817 = vmatprep.subr.mxu0 0.0
        %818 = vmatpush1.msra.mxu0 0.0
        %819 = vmatprep.subr.mxu0 0.0
        %820 = vmatpush1.msra.mxu0 0.0
        %821 = vmatprep.subr.mxu0 0.0
        %822 = vmatpush1.msra.mxu0 0.0
        %823 = vmatprep.subr.mxu0 0.0
        %824 = vmatpush1.msra.mxu0 0.0
        %825 = vmatprep.subr.mxu0 0.0
        %826 = vmatpush1.msra.mxu0 0.0
        %827 = vmatprep.subr.mxu0 0.0
        %828 = vmatpush1.msra.mxu0 0.0
        %829 = vmatprep.subr.mxu0 0.0
        %830 = vmatpush1.msra.mxu0 0.0
        %831 = vmatprep.subr.mxu0 0.0
        %832 = vmatpush1.msra.mxu0 %v799
        %833 = vmatprep.subr.mxu0 0.0
        %834 = vmatpush2.msra.mxu0 0.0
        %835 = vmatprep.subr.mxu0 0.0
        %836 = vmatpush2.msra.mxu0 0.0
        %837 = vmatprep.subr.mxu0 0.0
        %838 = vmatpush2.msra.mxu0 0.0
        %839 = vmatprep.subr.mxu0 0.0
        %840 = vmatpush2.msra.mxu0 0.0
        %841 = vmatprep.subr.mxu0 0.0
        %842 = vmatpush2.msra.mxu0 0.0
        %843 = vmatprep.subr.mxu0 0.0
        %844 = vmatpush2.msra.mxu0 0.0
        %845 = vmatprep.subr.mxu0 0.0
        %846 = vmatpush2.msra.mxu0 0.0
        %847 = vmatprep.subr.mxu0 0.0
        %848 = vmatpush2.msra.mxu0 0.0
        %849 = vmatprep.subr.mxu0 0.0
        %850 = vmatpush2.msra.mxu0 0.0
        %851 = vmatprep.subr.mxu0 0.0
        %852 = vmatpush2.msra.mxu0 0.0
        %853 = vmatprep.subr.mxu0 0.0
        %854 = vmatpush2.msra.mxu0 0.0
        %855 = vmatprep.subr.mxu0 0.0
        %856 = vmatpush2.msra.mxu0 0.0
        %857 = vmatprep.subr.mxu0 0.0
        %858 = vmatpush2.msra.mxu0 0.0
        %859 = vmatprep.subr.mxu0 0.0
        %860 = vmatpush2.msra.mxu0 0.0
        %861 = vmatprep.subr.mxu0 0.0
        %862 = vmatpush2.msra.mxu0 0.0
        %863 = vmatprep.subr.mxu0 0.0
        %864 = vmatpush2.msra.mxu0 0.0
        %865 = vmatprep.mubr.f32.mxu0 0.0
        %866 = vmatmul.mubr.f32.gmra.mxu0 %v775
        %v867 = vpop.f32.mrf.mxu0
        %v868 = vadd.f32 0.0, %v867
        %v869 = vpop.f32.mrf.mxu0
        %870 = vmatprep.mubr.f32.mxu0 0.0
        %871 = vmatmul.mubr.f32.gmra.mxu0 %v778
        %v872 = vpop.f32.mrf.mxu0
        %v873 = vadd.f32 0.0, %v872
        %v874 = vpop.f32.mrf.mxu0
        %875 = vmatprep.mubr.f32.mxu0 0.0
        %876 = vmatmul.mubr.f32.gmra.mxu0 %v781
        %v877 = vpop.f32.mrf.mxu0
        %v878 = vadd.f32 0.0, %v877
        %v879 = vpop.f32.mrf.mxu0
        %880 = vmatprep.mubr.f32.mxu0 0.0
        %881 = vmatmul.mubr.f32.gmra.mxu0 %v784
        %v882 = vpop.f32.mrf.mxu0
        %v883 = vadd.f32 0.0, %v882
        %v884 = vpop.f32.mrf.mxu0
        %885 = vmatprep.mubr.f32.mxu0 0.0
        %886 = vmatmul.mubr.f32.gmra.mxu0 %v787
        %v887 = vpop.f32.mrf.mxu0
        %v888 = vadd.f32 0.0, %v887
        %v889 = vpop.f32.mrf.mxu0
        %890 = vmatprep.mubr.f32.mxu0 0.0
        %891 = vmatmul.mubr.f32.gmra.mxu0 %v790
        %v892 = vpop.f32.mrf.mxu0
        %v893 = vadd.f32 0.0, %v892
        %v894 = vpop.f32.mrf.mxu0
        %895 = vmatprep.mubr.f32.mxu0 0.0
        %896 = vmatmul.mubr.f32.gmra.mxu0 %v793
        %v897 = vpop.f32.mrf.mxu0
        %v898 = vadd.f32 0.0, %v897
        %v899 = vpop.f32.mrf.mxu0
        %900 = vmatprep.mubr.f32.mxu0 0.0
        %901 = vmatmul.mubr.f32.gmra.mxu0 %v796
        %v902 = vpop.f32.mrf.mxu0
        %v903 = vadd.f32 0.0, %v902
        %v904 = vpop.f32.mrf.mxu0
        %905 = vdwg.mxu0
        %v906 = vmul.f32 %v868, 0.2
        %v907 = vmul.f32 %v873, 0.2
        %v908 = vmul.f32 %v878, 0.2
        %v909 = vmul.f32 %v883, 0.2
        %v910 = vmul.f32 %v888, 0.2
        %v911 = vmul.f32 %v893, 0.2
        %v912 = vmul.f32 %v898, 0.2
        %v913 = vmul.f32 %v903, 0.2
        %v914 = vmax.f32 %v868, %v906
        %v915 = vmax.f32 %v873, %v907
        %v916 = vmax.f32 %v878, %v908
        %v917 = vmax.f32 %v883, %v909
        %v918 = vmax.f32 %v888, %v910
        %v919 = vmax.f32 %v893, %v911
        %v920 = vmax.f32 %v898, %v912
        %v921 = vmax.f32 %v903, %v913
        %v922 = vsel %vm335, %v914, -9e+15
        %v923 = vsel %vm336, %v915, -9e+15
        %v924 = vsel %vm337, %v916, -9e+15
        %v925 = vsel %vm338, %v917, -9e+15
        %v926 = vsel %vm339, %v918, -9e+15
        %v927 = vsel %vm340, %v919, -9e+15
        %v928 = vsel %vm341, %v920, -9e+15
        %v929 = vsel %vm342, %v921, -9e+15
        %930 = vmax.xlane.f32.xlu0 %v922
        %v931 = vpop.xlane.xlu0 %930
        %932 = vmax.xlane.f32.xlu0 %v923
        %v933 = vpop.xlane.xlu0 %932
        %934 = vmax.xlane.f32.xlu0 %v924
        %v935 = vpop.xlane.xlu0 %934
        %936 = vmax.xlane.f32.xlu0 %v925
        %v937 = vpop.xlane.xlu0 %936
        %938 = vmax.xlane.f32.xlu0 %v926
        %v939 = vpop.xlane.xlu0 %938
        %940 = vmax.xlane.f32.xlu0 %v927
        %v941 = vpop.xlane.xlu0 %940
        %942 = vmax.xlane.f32.xlu0 %v928
        %v943 = vpop.xlane.xlu0 %942
        %944 = vmax.xlane.f32.xlu0 %v929
        %v945 = vpop.xlane.xlu0 %944
        %v946 = vsub.f32 %v922, %v931
        %v947 = vsub.f32 %v923, %v933
        %v948 = vsub.f32 %v924, %v935
        %v949 = vsub.f32 %v925, %v937
        %v950 = vsub.f32 %v926, %v939
        %v951 = vsub.f32 %v927, %v941
        %v952 = vsub.f32 %v928, %v943
        %v953 = vsub.f32 %v929, %v945
        %v954 = vmul.f32 %v946, 1.442695
        %v955 = vpow.pop %v954
        %v956 = vmul.f32 %v947, 1.442695
        %v957 = vpow.pop %v956
        %v958 = vmul.f32 %v948, 1.442695
        %v959 = vpow.pop %v958
        %v960 = vmul.f32 %v949, 1.442695
        %v961 = vpow.pop %v960
        %v962 = vmul.f32 %v950, 1.442695
        %v963 = vpow.pop %v962
        %v964 = vmul.f32 %v951, 1.442695
        %v965 = vpow.pop %v964
        %v966 = vmul.f32 %v952, 1.442695
        %v967 = vpow.pop %v966
        %v968 = vmul.f32 %v953, 1.442695
        %v969 = vpow.pop %v968
        %970 = vadd.xlane.f32.xlu0 %v955
        %v971 = vpop.xlane.xlu0 %970
        %972 = vadd.xlane.f32.xlu0 %v957
        %v973 = vpop.xlane.xlu0 %972
        %974 = vadd.xlane.f32.xlu0 %v959
        %v975 = vpop.xlane.xlu0 %974
        %976 = vadd.xlane.f32.xlu0 %v961
        %v977 = vpop.xlane.xlu0 %976
        %978 = vadd.xlane.f32.xlu0 %v963
        %v979 = vpop.xlane.xlu0 %978
        %980 = vadd.xlane.f32.xlu0 %v965
        %v981 = vpop.xlane.xlu0 %980
        %982 = vadd.xlane.f32.xlu0 %v967
        %v983 = vpop.xlane.xlu0 %982
        %984 = vadd.xlane.f32.xlu0 %v969
        %v985 = vpop.xlane.xlu0 %984
        %v986 = vpack.c.bf16 %v957, %v955
        %v987 = vpack.c.bf16 %v961, %v959
        %v988 = vpack.c.bf16 %v965, %v963
        %v989 = vpack.c.bf16 %v969, %v967
        %s990 = scalar_lea.vmem %s3, 64
        %v991 = vld [vmem:[%s990] sm:$0xf]
        %v992 = vld [vmem:[%s990 + $0x4] sm:$0xf]
        %v993 = vld [vmem:[%s990 + $0x8] sm:$0xf]
        %v994 = vld [vmem:[%s990 + $0xc] sm:$0xf]
        %v995 = vld [vmem:[%s990 + $0x10] sm:$0xf]
        %v996 = vld [vmem:[%s990 + $0x14] sm:$0xf]
        %v997 = vld [vmem:[%s990 + $0x18] sm:$0xf]
        %v998 = vld [vmem:[%s990 + $0x1c] sm:$0xf]
        %v999 = vld [vmem:[%s990 + $0x20] sm:$0xf]
        %v1000 = vld [vmem:[%s990 + $0x24] sm:$0xf]
        %v1001 = vld [vmem:[%s990 + $0x28] sm:$0xf]
        %v1002 = vld [vmem:[%s990 + $0x2c] sm:$0xf]
        %v1003 = vld [vmem:[%s990 + $0x30] sm:$0xf]
        %v1004 = vld [vmem:[%s990 + $0x34] sm:$0xf]
        %v1005 = vld [vmem:[%s990 + $0x38] sm:$0xf]
        %v1006 = vld [vmem:[%s990 + $0x3c] sm:$0xf]
        %v1023 = vunpack.c.l.b16 %v991
        %v1024 = vunpack.c.l.b16 %v992
        %v1025 = vunpack.c.l.b16 %v993
        %v1026 = vunpack.c.l.b16 %v994
        %v1027 = vunpack.c.l.b16 %v995
        %v1028 = vunpack.c.l.b16 %v996
        %v1029 = vunpack.c.l.b16 %v997
        %v1030 = vunpack.c.l.b16 %v998
        %v1031 = vunpack.c.l.b16 %v999
        %v1032 = vunpack.c.l.b16 %v1000
        %v1033 = vunpack.c.l.b16 %v1001
        %v1034 = vunpack.c.l.b16 %v1002
        %v1035 = vunpack.c.l.b16 %v1003
        %v1036 = vunpack.c.l.b16 %v1004
        %v1037 = vunpack.c.l.b16 %v1005
        %v1038 = vunpack.c.l.b16 %v1006
        %v1039 = vpack.c.b16 %v1024, %v1023
        %v1040 = vpack.c.b16 %v1026, %v1025
        %v1041 = vpack.c.b16 %v1028, %v1027
        %v1042 = vpack.c.b16 %v1030, %v1029
        %v1043 = vpack.c.b16 %v1032, %v1031
        %v1044 = vpack.c.b16 %v1034, %v1033
        %v1045 = vpack.c.b16 %v1036, %v1035
        %v1046 = vpack.c.b16 %v1038, %v1037
        %1055 = vmatprep.subr.bf16.mxu0 0
        %1056 = vmatpush1.bf16.msra.mxu0 %v1046
        %1057 = vmatprep.subr.bf16.mxu0 0
        %1058 = vmatpush1.bf16.msra.mxu0 %v1045
        %1059 = vmatprep.subr.bf16.mxu0 0
        %1060 = vmatpush1.bf16.msra.mxu0 %v1044
        %1061 = vmatprep.subr.bf16.mxu0 0
        %1062 = vmatpush1.bf16.msra.mxu0 %v1043
        %1063 = vmatprep.subr.bf16.mxu0 0
        %1064 = vmatpush1.bf16.msra.mxu0 %v1042
        %1065 = vmatprep.subr.bf16.mxu0 0
        %1066 = vmatpush1.bf16.msra.mxu0 %v1041
        %1067 = vmatprep.subr.bf16.mxu0 0
        %1068 = vmatpush1.bf16.msra.mxu0 %v1040
        %1069 = vmatprep.subr.bf16.mxu0 0
        %1070 = vmatpush1.bf16.msra.mxu0 %v1039
        %1071 = vmatprep.subr.bf16.mxu0 0
        %1072 = vmatpush2.bf16.msra.mxu0 0
        %1073 = vmatprep.subr.bf16.mxu0 0
        %1074 = vmatpush2.bf16.msra.mxu0 0
        %1075 = vmatprep.subr.bf16.mxu0 0
        %1076 = vmatpush2.bf16.msra.mxu0 0
        %1077 = vmatprep.subr.bf16.mxu0 0
        %1078 = vmatpush2.bf16.msra.mxu0 0
        %1079 = vmatprep.subr.bf16.mxu0 0
        %1080 = vmatpush2.bf16.msra.mxu0 0
        %1081 = vmatprep.subr.bf16.mxu0 0
        %1082 = vmatpush2.bf16.msra.mxu0 0
        %1083 = vmatprep.subr.bf16.mxu0 0
        %1084 = vmatpush2.bf16.msra.mxu0 0
        %1085 = vmatprep.subr.bf16.mxu0 0
        %1086 = vmatpush2.bf16.msra.mxu0 0
        %1087 = vmatprep.mubr.bf16.mxu0 0
        %1088 = vmatmul.mubr.bf16.gmra.mxu0 %v986
        %v1089 = vpop.f32.mrf.mxu0
        %v1090 = vadd.f32 0.0, %v1089
        %v1091 = vpop.f32.mrf.mxu0
        %v1092 = vpop.f32.mrf.mxu0
        %v1093 = vadd.f32 0.0, %v1092
        %v1094 = vpop.f32.mrf.mxu0
        %1095 = vmatprep.mubr.bf16.mxu0 0
        %1096 = vmatmul.mubr.bf16.gmra.mxu0 %v987
        %v1097 = vpop.f32.mrf.mxu0
        %v1098 = vadd.f32 0.0, %v1097
        %v1099 = vpop.f32.mrf.mxu0
        %v1100 = vpop.f32.mrf.mxu0
        %v1101 = vadd.f32 0.0, %v1100
        %v1102 = vpop.f32.mrf.mxu0
        %1103 = vmatprep.mubr.bf16.mxu0 0
        %1104 = vmatmul.mubr.bf16.gmra.mxu0 %v988
        %v1105 = vpop.f32.mrf.mxu0
        %v1106 = vadd.f32 0.0, %v1105
        %v1107 = vpop.f32.mrf.mxu0
        %v1108 = vpop.f32.mrf.mxu0
        %v1109 = vadd.f32 0.0, %v1108
        %v1110 = vpop.f32.mrf.mxu0
        %1111 = vmatprep.mubr.bf16.mxu0 0
        %1112 = vmatmul.mubr.bf16.gmra.mxu0 %v989
        %v1113 = vpop.f32.mrf.mxu0
        %v1114 = vadd.f32 0.0, %v1113
        %v1115 = vpop.f32.mrf.mxu0
        %v1116 = vpop.f32.mrf.mxu0
        %v1117 = vadd.f32 0.0, %v1116
        %v1118 = vpop.f32.mrf.mxu0
        %1119 = vdwg.mxu0
        %v1120 = vrcp.pop %v971
        %v1121 = vrcp.pop %v973
        %v1122 = vrcp.pop %v975
        %v1123 = vrcp.pop %v977
        %v1124 = vrcp.pop %v979
        %v1125 = vrcp.pop %v981
        %v1126 = vrcp.pop %v983
        %v1127 = vrcp.pop %v985
        %v1128 = vmul.f32 %v1090, %v1120
        %v1129 = vmul.f32 %v1093, %v1121
        %v1130 = vmul.f32 %v1098, %v1122
        %v1131 = vmul.f32 %v1101, %v1123
        %v1132 = vmul.f32 %v1106, %v1124
        %v1133 = vmul.f32 %v1109, %v1125
        %v1134 = vmul.f32 %v1114, %v1126
        %v1135 = vmul.f32 %v1117, %v1127
        %vm1136 = vcmp.gt.f32.partialorder %v1128, 0.0
        %vm1137 = vcmp.gt.f32.partialorder %v1129, 0.0
        %vm1138 = vcmp.gt.f32.partialorder %v1130, 0.0
        %vm1139 = vcmp.gt.f32.partialorder %v1131, 0.0
        %vm1140 = vcmp.gt.f32.partialorder %v1132, 0.0
        %vm1141 = vcmp.gt.f32.partialorder %v1133, 0.0
        %vm1142 = vcmp.gt.f32.partialorder %v1134, 0.0
        %vm1143 = vcmp.gt.f32.partialorder %v1135, 0.0
        %v1144 = vmin.f32 %v1128, 0.0
        %v1145 = vmin.f32 %v1129, 0.0
        %v1146 = vmin.f32 %v1130, 0.0
        %v1147 = vmin.f32 %v1131, 0.0
        %v1148 = vmin.f32 %v1132, 0.0
        %v1149 = vmin.f32 %v1133, 0.0
        %v1150 = vmin.f32 %v1134, 0.0
        %v1151 = vmin.f32 %v1135, 0.0
        %v1152 = vmul.f32 %v1144, 1.442695
        %v1153 = vpow.pop %v1152
        %v1154 = vmul.f32 %v1145, 1.442695
        %v1155 = vpow.pop %v1154
        %v1156 = vmul.f32 %v1146, 1.442695
        %v1157 = vpow.pop %v1156
        %v1158 = vmul.f32 %v1147, 1.442695
        %v1159 = vpow.pop %v1158
        %v1160 = vmul.f32 %v1148, 1.442695
        %v1161 = vpow.pop %v1160
        %v1162 = vmul.f32 %v1149, 1.442695
        %v1163 = vpow.pop %v1162
        %v1164 = vmul.f32 %v1150, 1.442695
        %v1165 = vpow.pop %v1164
        %v1166 = vmul.f32 %v1151, 1.442695
        %v1167 = vpow.pop %v1166
        %v1168 = vsub.f32 %v1153, 1.0
        %v1169 = vsub.f32 %v1155, 1.0
        %v1170 = vsub.f32 %v1157, 1.0
        %v1171 = vsub.f32 %v1159, 1.0
        %v1172 = vsub.f32 %v1161, 1.0
        %v1173 = vsub.f32 %v1163, 1.0
        %v1174 = vsub.f32 %v1165, 1.0
        %v1175 = vsub.f32 %v1167, 1.0
        %v1176 = vsel %vm1136, %v1128, %v1168
        %v1177 = vsel %vm1137, %v1129, %v1169
        %v1178 = vsel %vm1138, %v1130, %v1170
        %v1179 = vsel %vm1139, %v1131, %v1171
        %v1180 = vsel %vm1140, %v1132, %v1172
        %v1181 = vsel %vm1141, %v1133, %v1173
        %v1182 = vsel %vm1142, %v1134, %v1174
        %v1183 = vsel %vm1143, %v1135, %v1175
        %1192 = vrot.lane.b32.xlu0 %v1176, 16
        %v1193 = vpop.permute.xlu0 %1192
        %1194 = vrot.lane.b32.xlu0 %v1177, 16
        %v1195 = vpop.permute.xlu0 %1194
        %1196 = vrot.lane.b32.xlu0 %v1178, 16
        %v1197 = vpop.permute.xlu0 %1196
        %1198 = vrot.lane.b32.xlu0 %v1179, 16
        %v1199 = vpop.permute.xlu0 %1198
        %1200 = vrot.lane.b32.xlu0 %v1180, 16
        %v1201 = vpop.permute.xlu0 %1200
        %1202 = vrot.lane.b32.xlu0 %v1181, 16
        %v1203 = vpop.permute.xlu0 %1202
        %1204 = vrot.lane.b32.xlu0 %v1182, 16
        %v1205 = vpop.permute.xlu0 %1204
        %1206 = vrot.lane.b32.xlu0 %v1183, 16
        %v1207 = vpop.permute.xlu0 %1206
        %vm1216 = vcmask 130048
        %v1217 = vsel %vm1216, %v755, %v1193
        %v1218 = vsel %vm1216, %v756, %v1195
        %v1219 = vsel %vm1216, %v757, %v1197
        %v1220 = vsel %vm1216, %v758, %v1199
        %v1221 = vsel %vm1216, %v759, %v1201
        %v1222 = vsel %vm1216, %v760, %v1203
        %v1223 = vsel %vm1216, %v761, %v1205
        %v1224 = vsel %vm1216, %v762, %v1207
        %vm1225 = vcmask 261120
        %v1226 = vsel %vm1225, %v1217, 0.0
        %v1227 = vsel %vm1225, %v1218, 0.0
        %v1228 = vsel %vm1225, %v1219, 0.0
        %v1229 = vsel %vm1225, %v1220, 0.0
        %v1230 = vsel %vm1225, %v1221, 0.0
        %v1231 = vsel %vm1225, %v1222, 0.0
        %v1232 = vsel %vm1225, %v1223, 0.0
        %v1233 = vsel %vm1225, %v1224, 0.0
        %v1234 = vpack.c.bf16 %v1227, %v1226
        %v1235 = vpack.c.bf16 %v1229, %v1228
        %v1236 = vpack.c.bf16 %v1231, %v1230
        %v1237 = vpack.c.bf16 %v1233, %v1232
        %v1242 = vunpack.c.l.b16 %v1234
        %v1243 = vunpack.c.h.b16 %v1234
        %v1244 = vunpack.c.l.b16 %v1235
        %v1245 = vunpack.c.h.b16 %v1235
        %v1246 = vunpack.c.l.b16 %v1236
        %v1247 = vunpack.c.h.b16 %v1236
        %v1248 = vunpack.c.l.b16 %v1237
        %v1249 = vunpack.c.h.b16 %v1237
        %v1250 = vpack.c.b16 %v1242, %v1242
        %v1251 = vpack.c.b16 %v1243, %v1243
        %v1252 = vpack.c.b16 %v1244, %v1244
        %v1253 = vpack.c.b16 %v1245, %v1245
        %v1254 = vpack.c.b16 %v1246, %v1246
        %v1255 = vpack.c.b16 %v1247, %v1247
        %v1256 = vpack.c.b16 %v1248, %v1248
        %v1257 = vpack.c.b16 %v1249, %v1249
        %1266 = vst [vmem:[%s307] sm:$0xf] %v1250
        %1267 = vst [vmem:[%s307 + $0x4] sm:$0xf] %v1251
        %1268 = vst [vmem:[%s307 + $0x8] sm:$0xf] %v1252
        %1269 = vst [vmem:[%s307 + $0xc] sm:$0xf] %v1253
        %1270 = vst [vmem:[%s307 + $0x10] sm:$0xf] %v1254
        %1271 = vst [vmem:[%s307 + $0x14] sm:$0xf] %v1255
        %1272 = vst [vmem:[%s307 + $0x18] sm:$0xf] %v1256
        %1273 = vst [vmem:[%s307 + $0x1c] sm:$0xf] %v1257
        %s1274 = sand.u32 %s120, 1
        %s1275 = scalar_lea.sflag [#allocation4], %s1274
        %s1276 = sand.u32 %s120, 1
        %s1277 = smul.addr %s1276, 32
        %s1278 = scalar_lea.vmem [#allocation3], %s1277
        // Predicated region
        $region75: #{tpu_custom_call.1} parent=69 // pred_check
          %p1279 = pneg %p130
        $region76: #{tpu_custom_call.1} parent=69 // pred_check_branch
          %1281 = sbr.rel (%p1279) target = $region78
        $region77: #{tpu_custom_call.1} parent=69 // pred_region
          %s1282 = smul.u32 8, %s18
          %s1284 = ssub.s32 512, 512
          %1285 = vsyncadd %s1275, %s1284
          %s1286 = smul.addr %s1282, 64
          %s1287 = scalar_lea.hbm %s4, %s1286
          %s1288 = sshll.u32 %s1278, 4
          %s1289 = int_to_ptr.vmem [resolvable:$true] %s1288
          %1294 = dma.vmem_to_hbm [thread:$0]  %s1289, 512, %s1287, %s1275, 64, 64, 4
        $region78: #{tpu_custom_call.1} parent=69 // pred_fallthru
          _
      $region70: #{tpu_custom_call.1} parent=5 // pred_fallthru
        _
      %p1295 = scmp.le.s32.totalorder 2, %s13
      // Predicated region
      $region79: #{tpu_custom_call.1} parent=5 // pred_check
        %p1296 = pneg %p1295
      $region80: #{tpu_custom_call.1} parent=5 // pred_check_branch
        %1298 = sbr.rel (%p1296) target = $region82
      $region81: #{tpu_custom_call.1} parent=5 // pred_region
        %s1299 = ssub.s32 %s13, 2
        // Predicated region
        $region83: #{tpu_custom_call.1} parent=81 // pred_check
          %p1300 = pneg %p136
        $region84: #{tpu_custom_call.1} parent=81 // pred_check_branch
          %1302 = sbr.rel (%p1300) target = $region86
        $region85: #{tpu_custom_call.1} parent=81 // pred_region
          %s1303 = sand.u32 %s121, 1
          %s1304 = scalar_lea.sflag [#allocation4], %s1303
          %s1305 = sand.u32 %s121, 1
          %s1306 = smul.addr %s1305, 32
          %s1307 = scalar_lea.vmem [#allocation3], %s1306
          %1308 = dma.done %s1304, 512
        $region86: #{tpu_custom_call.1} parent=81 // pred_fallthru
          _
      $region82: #{tpu_custom_call.1} parent=5 // pred_fallthru
        _
    $region6: #{tpu_custom_call.1} parent=1 // loop_footer
      %s17 = sadd.s32 1, %s13
    $region7: #{tpu_custom_call.1} parent=1 // loop_footer_branch
      %12 = sbr.rel target = $region3
    $region8: #{tpu_custom_call.1} parent=1 // loop_exit
      _
    %1309 = vsyncpa [#allocation4], 1
    %s1310 = scalar_lea.sflag [#allocation4], 1
    %1311 = vsyncpa %s1310, 1

</llo_original>
